<compile_context>
chip_gen: v6e
topology: v6e:2x2x1
jax: 0.10.0
libtpu: 0.0.40
codegen_flags: <defaults>
</compile_context>

<pallas_src>
import math

import jax
import jax.numpy as jnp
from jax.experimental import pallas as pl
from jax.experimental.pallas import tpu as pltpu  # noqa: F401  (TPU backend)

# ----------------------------- config (small) -----------------------------
B = 2            # batch
S = 8            # sequence length
BS = B * S
H = 32           # hidden size (backbone.config.hidden_size)
NH = 2           # attention heads
HD = H // NH     # head dim
I = 64           # FFN intermediate size
L = 2            # encoder layers
C = 5            # num_classes
CP = 128         # lane-padded classifier width
V = 100          # vocab size
VP = 128         # lane-padded vocab (one-hot width)
EPS = 1e-5

S_SHIFT = S.bit_length() - 1
assert (1 << S_SHIFT) == S, "S must be a power of two for the batch mask"

# ---- packed bf16 weight slab layout: [W_ROWS, W_COLS] ----
W_COLS = 384                      # three lane-aligned 128-wide column blocks
W_QKV_COL, W_WO_COL, W_W1_COL = 0, 128, 256
W2_ROW = L * H                    # 64  : w2 blocks ([I, H] each) start here
FC_ROW = W2_ROW + L * I           # 192 : classifier weight rows
W_ROWS = FC_ROW + H               # 224

# ---- packed f32 LN/bias slab layout: [VEC_ROWS, 128] ----
VEC_ROWS_PER_LAYER = 8
(V_LN1G, V_LN1B, V_BQKV, V_BO, V_LN2G, V_LN2B, V_B1, V_B2) = range(8)
VEC_FCB_ROW = L * VEC_ROWS_PER_LAYER      # 16
VEC_ROWS = VEC_FCB_ROW + 1                # 17


def _layernorm(x, g, b):
    mu = jnp.mean(x, axis=-1, keepdims=True)
    var = jnp.mean((x - mu) ** 2, axis=-1, keepdims=True)
    return (x - mu) * jax.lax.rsqrt(var + EPS) * g + b


def _model_kernel(ids_ref, emb_ref, w_ref, vec_ref, out_ref):
    f32, bf16 = jnp.float32, jnp.bfloat16

    # ---------------- embedding gather (one-hot matmul) + positions ----------------
    onehot = (jax.lax.broadcasted_iota(jnp.int32, (BS, VP), 1)
              == ids_ref[...]).astype(f32)                               # [BS, VP]
    h = (jnp.dot(onehot, emb_ref[0:VP, :], preferred_element_type=f32)
         + emb_ref[VP:VP + BS, :])                                       # [BS, H] f32

    # ---------------- block-diagonal batch mask (built once) ----------------
    rq = jax.lax.broadcasted_iota(jnp.int32, (BS, BS), 0)
    rk = jax.lax.broadcasted_iota(jnp.int32, (BS, BS), 1)
    same_batch = jnp.right_shift(rq, S_SHIFT) == jnp.right_shift(rk, S_SHIFT)
    mask_bias = jnp.where(same_batch, 0.0, -1e30).astype(f32)            # [BS, BS]

    scale = 1.0 / math.sqrt(HD)
    nt = (((1,), (1,)), ((), ()))    # contract last dims of both: A @ B.T

    # Static unrolled layer loop; every weight slice is a static index into a
    # VMEM-resident slab (no per-layer DMA).
    for l in range(L):
        wr = l * H
        vr = l * VEC_ROWS_PER_LAYER

        # ---------------- self-attention (pre-LN) ----------------
        xn = _layernorm(h, vec_ref[vr + V_LN1G, 0:H], vec_ref[vr + V_LN1B, 0:H])
        qkv = (jnp.dot(xn.astype(bf16),
                       w_ref[wr:wr + H, W_QKV_COL:W_QKV_COL + 3 * H],
                       preferred_element_type=f32)
               + vec_ref[vr + V_BQKV, 0:3 * H])                          # [BS, 3H]

        ctx = []
        for hi in range(NH):
            q = qkv[:, hi * HD:(hi + 1) * HD].astype(bf16)               # [BS, HD]
            k = qkv[:, H + hi * HD:H + (hi + 1) * HD].astype(bf16)
            v = qkv[:, 2 * H + hi * HD:2 * H + (hi + 1) * HD].astype(bf16)
            s = jax.lax.dot_general(q, k, nt, preferred_element_type=f32)  # [BS, BS]
            s = s * scale + mask_bias
            s = s - jnp.max(s, axis=-1, keepdims=True)
            p = jnp.exp(s)
            p = p * pl.reciprocal(jnp.sum(p, axis=-1, keepdims=True), approx=True)
            ctx.append(jnp.dot(p.astype(bf16), v, preferred_element_type=f32))
        ctx = jnp.concatenate(ctx, axis=-1)                              # [BS, H]

        attn = (jnp.dot(ctx.astype(bf16),
                        w_ref[wr:wr + H, W_WO_COL:W_WO_COL + H],
                        preferred_element_type=f32)
                + vec_ref[vr + V_BO, 0:H])
        h = h + attn

        # ---------------- feed-forward (pre-LN) ----------------
        xn = _layernorm(h, vec_ref[vr + V_LN2G, 0:H], vec_ref[vr + V_LN2B, 0:H])
        ff = (jnp.dot(xn.astype(bf16),
                      w_ref[wr:wr + H, W_W1_COL:W_W1_COL + I],
                      preferred_element_type=f32)
              + vec_ref[vr + V_B1, 0:I])                                 # [BS, I]
        # TODO(synk): HF BERT-style backbones use exact (erf) GELU; tanh approx kept.
        ff = jax.nn.gelu(ff, approximate=True)
        ff = (jnp.dot(ff.astype(bf16),
                      w_ref[W2_ROW + l * I:W2_ROW + (l + 1) * I, 0:H],
                      preferred_element_type=f32)
              + vec_ref[vr + V_B2, 0:H])                                 # [BS, H]
        h = h + ff

    # ---------------- CLS rows -> linear head (lane-padded output) ----------------
    cls = jnp.concatenate([h[b * S:b * S + 1, :] for b in range(B)], axis=0)  # [B, H]
    logits = (jnp.dot(cls.astype(bf16), w_ref[FC_ROW:FC_ROW + H, 0:CP],
                      preferred_element_type=f32)
              + vec_ref[VEC_FCB_ROW, 0:CP])                              # [B, CP]
    out_ref[...] = logits.astype(out_ref.dtype)


def pretrained_model_forward(x_ids, params):
    """x_ids: [B, S] int32 token ids; returns logits [B, C]."""
    ids2d = x_ids.reshape(BS, 1).astype(jnp.int32)
    logits_padded = pl.pallas_call(
        _model_kernel,
        out_shape=jax.ShapeDtypeStruct((B, CP), jnp.float32),
        # Grid-less single invocation: 4 whole-array VMEM inputs (<0.2 MiB).
    )(ids2d, params["emb"], params["w"], params["vec"])
    return logits_padded[:, :C]


def init_params(key):
    ks = jax.random.split(key, 7)
    std = 0.02
    tok = jax.random.normal(ks[0], (V, H), jnp.float32) * std
    pos = jax.random.normal(ks[1], (S, H), jnp.float32) * std
    wqkv = jax.random.normal(ks[2], (L, H, 3 * H), jnp.float32) * std
    wo = jax.random.normal(ks[3], (L, H, H), jnp.float32) * std
    w1 = jax.random.normal(ks[4], (L, H, I), jnp.float32) * std
    w2 = jax.random.normal(ks[5], (L, I, H), jnp.float32) * std
    fcw = jax.random.normal(ks[6], (H, C), jnp.float32) * std

    ln1_g = jnp.ones((L, H), jnp.float32)
    ln1_b = jnp.zeros((L, H), jnp.float32)
    ln2_g = jnp.ones((L, H), jnp.float32)
    ln2_b = jnp.zeros((L, H), jnp.float32)
    bqkv = jnp.zeros((L, 3 * H), jnp.float32)
    bo = jnp.zeros((L, H), jnp.float32)
    b1 = jnp.zeros((L, I), jnp.float32)
    b2 = jnp.zeros((L, H), jnp.float32)
    fcb = jnp.zeros((C,), jnp.float32)

    # ---- one bf16 slab for every matmul weight (single DMA, pre-cast once) ----
    w_slab = jnp.zeros((W_ROWS, W_COLS), jnp.float32)
    for l in range(L):
        w_slab = w_slab.at[l * H:(l + 1) * H, W_QKV_COL:W_QKV_COL + 3 * H].set(wqkv[l])
        w_slab = w_slab.at[l * H:(l + 1) * H, W_WO_COL:W_WO_COL + H].set(wo[l])
        w_slab = w_slab.at[l * H:(l + 1) * H, W_W1_COL:W_W1_COL + I].set(w1[l])
        w_slab = w_slab.at[W2_ROW + l * I:W2_ROW + (l + 1) * I, 0:H].set(w2[l])
    w_slab = w_slab.at[FC_ROW:FC_ROW + H, 0:C].set(fcw)   # lane-padded classifier
    w_slab = w_slab.astype(jnp.bfloat16)

    # ---- one f32 slab for LN params + biases (+ classifier bias) ----
    vec = jnp.zeros((VEC_ROWS, 128), jnp.float32)
    for l in range(L):
        r = l * VEC_ROWS_PER_LAYER
        vec = vec.at[r + V_LN1G, 0:H].set(ln1_g[l])
        vec = vec.at[r + V_LN1B, 0:H].set(ln1_b[l])
        vec = vec.at[r + V_BQKV, 0:3 * H].set(bqkv[l])
        vec = vec.at[r + V_BO, 0:H].set(bo[l])
        vec = vec.at[r + V_LN2G, 0:H].set(ln2_g[l])
        vec = vec.at[r + V_LN2B, 0:H].set(ln2_b[l])
        vec = vec.at[r + V_B1, 0:I].set(b1[l])
        vec = vec.at[r + V_B2, 0:H].set(b2[l])
    vec = vec.at[VEC_FCB_ROW, 0:C].set(fcb)

    # ---- one f32 embedding slab: vocab-padded token table + batch-tiled positions ----
    emb = jnp.zeros((VP + BS, H), jnp.float32)
    emb = emb.at[0:V, :].set(tok)
    emb = emb.at[VP:VP + BS, :].set(jnp.tile(pos, (B, 1)))

    return {"emb": emb, "w": w_slab, "vec": vec}


if __name__ == "__main__":
    k_params, k_ids = jax.random.split(jax.random.PRNGKey(0))
    params = init_params(k_params)

    # Deterministic token ids [B, S].
    x_ids = jax.random.randint(k_ids, (B, S), 0, V, jnp.int32)

    logits = pretrained_model_forward(x_ids, params)
    logits = jax.block_until_ready(logits)

    assert logits.shape == (B, C)
    assert bool(jnp.all(jnp.isfinite(logits)))
    print("KERNEL_OK")
</pallas_src>

<mosaic_0001>
module attributes {stable_mosaic.version = 11 : i64} {
  func.func @_model_kernel(%arg0: memref<16x1xi32, #tpu.memory_space<vmem>>, %arg1: memref<144x32xf32, #tpu.memory_space<vmem>>, %arg2: memref<224x384xbf16, #tpu.memory_space<vmem>>, %arg3: memref<17x128xf32, #tpu.memory_space<vmem>>, %arg4: memref<2x128xf32, #tpu.memory_space<vmem>>) attributes {dimension_semantics = [], scalar_prefetch = 0 : i64, scratch_operands = 0 : i64, tpu.core_type = #tpu.core_type<tc>} {
    %0 = tpu.iota {dimensions = array<i32: 1>} : vector<16x128xi32>
    %c0 = arith.constant 0 : index
    %c0_0 = arith.constant 0 : index
    %1 = vector.load %arg0[%c0, %c0_0] : memref<16x1xi32, #tpu.memory_space<vmem>>, vector<16x1xi32>
    %2 = vector.broadcast %1 : vector<16x1xi32> to vector<16x128xi32>
    %3 = arith.cmpi eq, %0, %2 : vector<16x128xi32>
    %4 = arith.extui %3 : vector<16x128xi1> to vector<16x128xi32>
    %5 = arith.sitofp %4 : vector<16x128xi32> to vector<16x128xf32>
    %c0_1 = arith.constant 0 : index
    %c0_2 = arith.constant 0 : index
    %6 = vector.load %arg1[%c0_1, %c0_2] : memref<144x32xf32, #tpu.memory_space<vmem>>, vector<128x32xf32>
    %cst = arith.constant dense<0.000000e+00> : vector<16x32xf32>
    %7 = tpu.matmul %5, %6, %cst {dimension_numbers = #tpu.dot_dimension_numbers<[1], [0], [0], [1], [0, 0, 1, 1], [], []>} : vector<16x128xf32>, vector<128x32xf32>, vector<16x32xf32> -> vector<16x32xf32>
    %c128 = arith.constant 128 : index
    %c0_3 = arith.constant 0 : index
    %8 = vector.load %arg1[%c128, %c0_3] : memref<144x32xf32, #tpu.memory_space<vmem>>, vector<16x32xf32>
    %9 = arith.addf %7, %8 : vector<16x32xf32>
    %10 = tpu.iota {dimensions = array<i32: 0>} : vector<16x16xi32>
    %11 = tpu.iota {dimensions = array<i32: 1>} : vector<16x16xi32>
    %c3_i32 = arith.constant 3 : i32
    %12 = vector.broadcast %c3_i32 : i32 to vector<16x16xi32>
    %13 = arith.shrsi %10, %12 : vector<16x16xi32>
    %c3_i32_4 = arith.constant 3 : i32
    %14 = vector.broadcast %c3_i32_4 : i32 to vector<16x16xi32>
    %15 = arith.shrsi %11, %14 : vector<16x16xi32>
    %16 = arith.cmpi eq, %13, %15 : vector<16x16xi32>
    %cst_5 = arith.constant 0.000000e+00 : f32
    %cst_6 = arith.constant -1.000000e+30 : f32
    %17 = vector.broadcast %cst_5 : f32 to vector<16x16xf32>
    %18 = vector.broadcast %cst_6 : f32 to vector<16x16xf32>
    %19 = arith.select %16, %17, %18 : vector<16x16xi1>, vector<16x16xf32>
    %c0_7 = arith.constant 0 : index
    %c0_8 = arith.constant 0 : index
    %20 = vector.load %arg3[%c0_7, %c0_8] : memref<17x128xf32, #tpu.memory_space<vmem>>, vector<1x32xf32>
    %21 = vector.shape_cast %20 : vector<1x32xf32> to vector<32xf32>
    %c1 = arith.constant 1 : index
    %c0_9 = arith.constant 0 : index
    %22 = vector.load %arg3[%c1, %c0_9] : memref<17x128xf32, #tpu.memory_space<vmem>>, vector<1x32xf32>
    %23 = vector.shape_cast %22 : vector<1x32xf32> to vector<32xf32>
    %cst_10 = arith.constant dense<0.000000e+00> : vector<16xf32>
    %24 = vector.multi_reduction <add>, %9, %cst_10 [1] : vector<16x32xf32> to vector<16xf32>
    %25 = vector.shape_cast %24 : vector<16xf32> to vector<16x1xf32>
    %cst_11 = arith.constant 3.200000e+01 : f32
    %26 = vector.broadcast %cst_11 : f32 to vector<16x1xf32>
    %27 = arith.divf %25, %26 : vector<16x1xf32>
    %28 = vector.broadcast %27 : vector<16x1xf32> to vector<16x32xf32>
    %29 = arith.subf %9, %28 : vector<16x32xf32>
    %30 = arith.mulf %29, %29 : vector<16x32xf32>
    %cst_12 = arith.constant dense<0.000000e+00> : vector<16xf32>
    %31 = vector.multi_reduction <add>, %30, %cst_12 [1] : vector<16x32xf32> to vector<16xf32>
    %32 = vector.shape_cast %31 : vector<16xf32> to vector<16x1xf32>
    %cst_13 = arith.constant 3.200000e+01 : f32
    %33 = vector.broadcast %cst_13 : f32 to vector<16x1xf32>
    %34 = arith.divf %32, %33 : vector<16x1xf32>
    %35 = vector.broadcast %27 : vector<16x1xf32> to vector<16x32xf32>
    %36 = arith.subf %9, %35 : vector<16x32xf32>
    %cst_14 = arith.constant 9.99999974E-6 : f32
    %37 = vector.broadcast %cst_14 : f32 to vector<16x1xf32>
    %38 = arith.addf %34, %37 : vector<16x1xf32>
    %39 = math.rsqrt %38 : vector<16x1xf32>
    %40 = vector.broadcast %39 : vector<16x1xf32> to vector<16x32xf32>
    %41 = arith.mulf %36, %40 : vector<16x32xf32>
    %42 = vector.shape_cast %21 : vector<32xf32> to vector<1x32xf32>
    %43 = vector.broadcast %42 : vector<1x32xf32> to vector<16x32xf32>
    %44 = arith.mulf %41, %43 : vector<16x32xf32>
    %45 = vector.shape_cast %23 : vector<32xf32> to vector<1x32xf32>
    %46 = vector.broadcast %45 : vector<1x32xf32> to vector<16x32xf32>
    %47 = arith.addf %44, %46 : vector<16x32xf32>
    %48 = arith.truncf %47 : vector<16x32xf32> to vector<16x32xbf16>
    %c0_15 = arith.constant 0 : index
    %c0_16 = arith.constant 0 : index
    %49 = vector.load %arg2[%c0_15, %c0_16] : memref<224x384xbf16, #tpu.memory_space<vmem>>, vector<32x96xbf16>
    %cst_17 = arith.constant dense<0.000000e+00> : vector<16x96xf32>
    %50 = tpu.matmul %48, %49, %cst_17 {dimension_numbers = #tpu.dot_dimension_numbers<[1], [0], [0], [1], [0, 0, 1, 1], [], []>} : vector<16x32xbf16>, vector<32x96xbf16>, vector<16x96xf32> -> vector<16x96xf32>
    %c2 = arith.constant 2 : index
    %c0_18 = arith.constant 0 : index
    %51 = vector.load %arg3[%c2, %c0_18] : memref<17x128xf32, #tpu.memory_space<vmem>>, vector<1x96xf32>
    %52 = vector.shape_cast %51 : vector<1x96xf32> to vector<96xf32>
    %53 = vector.shape_cast %52 : vector<96xf32> to vector<1x96xf32>
    %54 = vector.broadcast %53 : vector<1x96xf32> to vector<16x96xf32>
    %55 = arith.addf %50, %54 : vector<16x96xf32>
    %56 = vector.extract_strided_slice %55 {offsets = [0, 0], sizes = [16, 16], strides = [1, 1]} : vector<16x96xf32> to vector<16x16xf32>
    %57 = arith.truncf %56 : vector<16x16xf32> to vector<16x16xbf16>
    %58 = vector.extract_strided_slice %55 {offsets = [0, 32], sizes = [16, 16], strides = [1, 1]} : vector<16x96xf32> to vector<16x16xf32>
    %59 = arith.truncf %58 : vector<16x16xf32> to vector<16x16xbf16>
    %60 = vector.extract_strided_slice %55 {offsets = [0, 64], sizes = [16, 16], strides = [1, 1]} : vector<16x96xf32> to vector<16x16xf32>
    %61 = arith.truncf %60 : vector<16x16xf32> to vector<16x16xbf16>
    %cst_19 = arith.constant dense<0.000000e+00> : vector<16x16xf32>
    %62 = tpu.matmul %57, %59, %cst_19 {dimension_numbers = #tpu.dot_dimension_numbers<[1], [1], [0], [0], [0, 0, 1, 0], [], []>} : vector<16x16xbf16>, vector<16x16xbf16>, vector<16x16xf32> -> vector<16x16xf32>
    %cst_20 = arith.constant 2.500000e-01 : f32
    %63 = vector.broadcast %cst_20 : f32 to vector<16x16xf32>
    %64 = arith.mulf %62, %63 : vector<16x16xf32>
    %65 = arith.addf %64, %19 : vector<16x16xf32>
    %cst_21 = arith.constant dense<0xFF800000> : vector<16xf32>
    %66 = vector.multi_reduction <maximumf>, %65, %cst_21 [1] : vector<16x16xf32> to vector<16xf32>
    %67 = vector.shape_cast %66 : vector<16xf32> to vector<16x1xf32>
    %68 = vector.broadcast %67 : vector<16x1xf32> to vector<16x16xf32>
    %69 = arith.subf %65, %68 : vector<16x16xf32>
    %70 = math.exp %69 : vector<16x16xf32>
    %cst_22 = arith.constant dense<0.000000e+00> : vector<16xf32>
    %71 = vector.multi_reduction <add>, %70, %cst_22 [1] : vector<16x16xf32> to vector<16xf32>
    %72 = vector.shape_cast %71 : vector<16xf32> to vector<16x1xf32>
    %73 = tpu.reciprocal %72 {approx = true} : vector<16x1xf32> -> vector<16x1xf32>
    %74 = vector.broadcast %73 : vector<16x1xf32> to vector<16x16xf32>
    %75 = arith.mulf %70, %74 : vector<16x16xf32>
    %76 = arith.truncf %75 : vector<16x16xf32> to vector<16x16xbf16>
    %cst_23 = arith.constant dense<0.000000e+00> : vector<16x16xf32>
    %77 = tpu.matmul %76, %61, %cst_23 {dimension_numbers = #tpu.dot_dimension_numbers<[1], [0], [0], [1], [0, 0, 1, 1], [], []>} : vector<16x16xbf16>, vector<16x16xbf16>, vector<16x16xf32> -> vector<16x16xf32>
    %78 = vector.extract_strided_slice %55 {offsets = [0, 16], sizes = [16, 16], strides = [1, 1]} : vector<16x96xf32> to vector<16x16xf32>
    %79 = arith.truncf %78 : vector<16x16xf32> to vector<16x16xbf16>
    %80 = vector.extract_strided_slice %55 {offsets = [0, 48], sizes = [16, 16], strides = [1, 1]} : vector<16x96xf32> to vector<16x16xf32>
    %81 = arith.truncf %80 : vector<16x16xf32> to vector<16x16xbf16>
    %82 = vector.extract_strided_slice %55 {offsets = [0, 80], sizes = [16, 16], strides = [1, 1]} : vector<16x96xf32> to vector<16x16xf32>
    %83 = arith.truncf %82 : vector<16x16xf32> to vector<16x16xbf16>
    %cst_24 = arith.constant dense<0.000000e+00> : vector<16x16xf32>
    %84 = tpu.matmul %79, %81, %cst_24 {dimension_numbers = #tpu.dot_dimension_numbers<[1], [1], [0], [0], [0, 0, 1, 0], [], []>} : vector<16x16xbf16>, vector<16x16xbf16>, vector<16x16xf32> -> vector<16x16xf32>
    %cst_25 = arith.constant 2.500000e-01 : f32
    %85 = vector.broadcast %cst_25 : f32 to vector<16x16xf32>
    %86 = arith.mulf %84, %85 : vector<16x16xf32>
    %87 = arith.addf %86, %19 : vector<16x16xf32>
    %cst_26 = arith.constant dense<0xFF800000> : vector<16xf32>
    %88 = vector.multi_reduction <maximumf>, %87, %cst_26 [1] : vector<16x16xf32> to vector<16xf32>
    %89 = vector.shape_cast %88 : vector<16xf32> to vector<16x1xf32>
    %90 = vector.broadcast %89 : vector<16x1xf32> to vector<16x16xf32>
    %91 = arith.subf %87, %90 : vector<16x16xf32>
    %92 = math.exp %91 : vector<16x16xf32>
    %cst_27 = arith.constant dense<0.000000e+00> : vector<16xf32>
    %93 = vector.multi_reduction <add>, %92, %cst_27 [1] : vector<16x16xf32> to vector<16xf32>
    %94 = vector.shape_cast %93 : vector<16xf32> to vector<16x1xf32>
    %95 = tpu.reciprocal %94 {approx = true} : vector<16x1xf32> -> vector<16x1xf32>
    %96 = vector.broadcast %95 : vector<16x1xf32> to vector<16x16xf32>
    %97 = arith.mulf %92, %96 : vector<16x16xf32>
    %98 = arith.truncf %97 : vector<16x16xf32> to vector<16x16xbf16>
    %cst_28 = arith.constant dense<0.000000e+00> : vector<16x16xf32>
    %99 = tpu.matmul %98, %83, %cst_28 {dimension_numbers = #tpu.dot_dimension_numbers<[1], [0], [0], [1], [0, 0, 1, 1], [], []>} : vector<16x16xbf16>, vector<16x16xbf16>, vector<16x16xf32> -> vector<16x16xf32>
    %100 = tpu.concatenate %77, %99 in 1 : vector<16x16xf32>, vector<16x16xf32> -> vector<16x32xf32>
    %101 = arith.truncf %100 : vector<16x32xf32> to vector<16x32xbf16>
    %c0_29 = arith.constant 0 : index
    %c128_30 = arith.constant 128 : index
    %102 = vector.load %arg2[%c0_29, %c128_30] : memref<224x384xbf16, #tpu.memory_space<vmem>>, vector<32x32xbf16>
    %cst_31 = arith.constant dense<0.000000e+00> : vector<16x32xf32>
    %103 = tpu.matmul %101, %102, %cst_31 {dimension_numbers = #tpu.dot_dimension_numbers<[1], [0], [0], [1], [0, 0, 1, 1], [], []>} : vector<16x32xbf16>, vector<32x32xbf16>, vector<16x32xf32> -> vector<16x32xf32>
    %c3 = arith.constant 3 : index
    %c0_32 = arith.constant 0 : index
    %104 = vector.load %arg3[%c3, %c0_32] : memref<17x128xf32, #tpu.memory_space<vmem>>, vector<1x32xf32>
    %105 = vector.shape_cast %104 : vector<1x32xf32> to vector<32xf32>
    %106 = vector.shape_cast %105 : vector<32xf32> to vector<1x32xf32>
    %107 = vector.broadcast %106 : vector<1x32xf32> to vector<16x32xf32>
    %108 = arith.addf %103, %107 : vector<16x32xf32>
    %109 = arith.addf %9, %108 : vector<16x32xf32>
    %c4 = arith.constant 4 : index
    %c0_33 = arith.constant 0 : index
    %110 = vector.load %arg3[%c4, %c0_33] : memref<17x128xf32, #tpu.memory_space<vmem>>, vector<1x32xf32>
    %111 = vector.shape_cast %110 : vector<1x32xf32> to vector<32xf32>
    %c5 = arith.constant 5 : index
    %c0_34 = arith.constant 0 : index
    %112 = vector.load %arg3[%c5, %c0_34] : memref<17x128xf32, #tpu.memory_space<vmem>>, vector<1x32xf32>
    %113 = vector.shape_cast %112 : vector<1x32xf32> to vector<32xf32>
    %cst_35 = arith.constant dense<0.000000e+00> : vector<16xf32>
    %114 = vector.multi_reduction <add>, %109, %cst_35 [1] : vector<16x32xf32> to vector<16xf32>
    %115 = vector.shape_cast %114 : vector<16xf32> to vector<16x1xf32>
    %cst_36 = arith.constant 3.200000e+01 : f32
    %116 = vector.broadcast %cst_36 : f32 to vector<16x1xf32>
    %117 = arith.divf %115, %116 : vector<16x1xf32>
    %118 = vector.broadcast %117 : vector<16x1xf32> to vector<16x32xf32>
    %119 = arith.subf %109, %118 : vector<16x32xf32>
    %120 = arith.mulf %119, %119 : vector<16x32xf32>
    %cst_37 = arith.constant dense<0.000000e+00> : vector<16xf32>
    %121 = vector.multi_reduction <add>, %120, %cst_37 [1] : vector<16x32xf32> to vector<16xf32>
    %122 = vector.shape_cast %121 : vector<16xf32> to vector<16x1xf32>
    %cst_38 = arith.constant 3.200000e+01 : f32
    %123 = vector.broadcast %cst_38 : f32 to vector<16x1xf32>
    %124 = arith.divf %122, %123 : vector<16x1xf32>
    %125 = vector.broadcast %117 : vector<16x1xf32> to vector<16x32xf32>
    %126 = arith.subf %109, %125 : vector<16x32xf32>
    %cst_39 = arith.constant 9.99999974E-6 : f32
    %127 = vector.broadcast %cst_39 : f32 to vector<16x1xf32>
    %128 = arith.addf %124, %127 : vector<16x1xf32>
    %129 = math.rsqrt %128 : vector<16x1xf32>
    %130 = vector.broadcast %129 : vector<16x1xf32> to vector<16x32xf32>
    %131 = arith.mulf %126, %130 : vector<16x32xf32>
    %132 = vector.shape_cast %111 : vector<32xf32> to vector<1x32xf32>
    %133 = vector.broadcast %132 : vector<1x32xf32> to vector<16x32xf32>
    %134 = arith.mulf %131, %133 : vector<16x32xf32>
    %135 = vector.shape_cast %113 : vector<32xf32> to vector<1x32xf32>
    %136 = vector.broadcast %135 : vector<1x32xf32> to vector<16x32xf32>
    %137 = arith.addf %134, %136 : vector<16x32xf32>
    %138 = arith.truncf %137 : vector<16x32xf32> to vector<16x32xbf16>
    %c0_40 = arith.constant 0 : index
    %c256 = arith.constant 256 : index
    %139 = vector.load %arg2[%c0_40, %c256] : memref<224x384xbf16, #tpu.memory_space<vmem>>, vector<32x64xbf16>
    %cst_41 = arith.constant dense<0.000000e+00> : vector<16x64xf32>
    %140 = tpu.matmul %138, %139, %cst_41 {dimension_numbers = #tpu.dot_dimension_numbers<[1], [0], [0], [1], [0, 0, 1, 1], [], []>} : vector<16x32xbf16>, vector<32x64xbf16>, vector<16x64xf32> -> vector<16x64xf32>
    %c6 = arith.constant 6 : index
    %c0_42 = arith.constant 0 : index
    %141 = vector.load %arg3[%c6, %c0_42] : memref<17x128xf32, #tpu.memory_space<vmem>>, vector<1x64xf32>
    %142 = vector.shape_cast %141 : vector<1x64xf32> to vector<64xf32>
    %143 = vector.shape_cast %142 : vector<64xf32> to vector<1x64xf32>
    %144 = vector.broadcast %143 : vector<1x64xf32> to vector<16x64xf32>
    %145 = arith.addf %140, %144 : vector<16x64xf32>
    %146 = arith.mulf %145, %145 : vector<16x64xf32>
    %147 = arith.mulf %145, %146 : vector<16x64xf32>
    %cst_43 = arith.constant 4.471500e-02 : f32
    %148 = vector.broadcast %cst_43 : f32 to vector<16x64xf32>
    %149 = arith.mulf %148, %147 : vector<16x64xf32>
    %150 = arith.addf %145, %149 : vector<16x64xf32>
    %cst_44 = arith.constant 0.797884583 : f32
    %151 = vector.broadcast %cst_44 : f32 to vector<16x64xf32>
    %152 = arith.mulf %151, %150 : vector<16x64xf32>
    %153 = math.tanh %152 : vector<16x64xf32>
    %cst_45 = arith.constant 1.000000e+00 : f32
    %154 = vector.broadcast %cst_45 : f32 to vector<16x64xf32>
    %155 = arith.addf %154, %153 : vector<16x64xf32>
    %cst_46 = arith.constant 5.000000e-01 : f32
    %156 = vector.broadcast %cst_46 : f32 to vector<16x64xf32>
    %157 = arith.mulf %156, %155 : vector<16x64xf32>
    %158 = arith.mulf %145, %157 : vector<16x64xf32>
    %159 = arith.truncf %158 : vector<16x64xf32> to vector<16x64xbf16>
    %c64 = arith.constant 64 : index
    %c0_47 = arith.constant 0 : index
    %160 = vector.load %arg2[%c64, %c0_47] : memref<224x384xbf16, #tpu.memory_space<vmem>>, vector<64x32xbf16>
    %cst_48 = arith.constant dense<0.000000e+00> : vector<16x32xf32>
    %161 = tpu.matmul %159, %160, %cst_48 {dimension_numbers = #tpu.dot_dimension_numbers<[1], [0], [0], [1], [0, 0, 1, 1], [], []>} : vector<16x64xbf16>, vector<64x32xbf16>, vector<16x32xf32> -> vector<16x32xf32>
    %c7 = arith.constant 7 : index
    %c0_49 = arith.constant 0 : index
    %162 = vector.load %arg3[%c7, %c0_49] : memref<17x128xf32, #tpu.memory_space<vmem>>, vector<1x32xf32>
    %163 = vector.shape_cast %162 : vector<1x32xf32> to vector<32xf32>
    %164 = vector.shape_cast %163 : vector<32xf32> to vector<1x32xf32>
    %165 = vector.broadcast %164 : vector<1x32xf32> to vector<16x32xf32>
    %166 = arith.addf %161, %165 : vector<16x32xf32>
    %167 = arith.addf %109, %166 : vector<16x32xf32>
    %c8 = arith.constant 8 : index
    %c0_50 = arith.constant 0 : index
    %168 = vector.load %arg3[%c8, %c0_50] : memref<17x128xf32, #tpu.memory_space<vmem>>, vector<1x32xf32>
    %169 = vector.shape_cast %168 : vector<1x32xf32> to vector<32xf32>
    %c9 = arith.constant 9 : index
    %c0_51 = arith.constant 0 : index
    %170 = vector.load %arg3[%c9, %c0_51] : memref<17x128xf32, #tpu.memory_space<vmem>>, vector<1x32xf32>
    %171 = vector.shape_cast %170 : vector<1x32xf32> to vector<32xf32>
    %cst_52 = arith.constant dense<0.000000e+00> : vector<16xf32>
    %172 = vector.multi_reduction <add>, %167, %cst_52 [1] : vector<16x32xf32> to vector<16xf32>
    %173 = vector.shape_cast %172 : vector<16xf32> to vector<16x1xf32>
    %cst_53 = arith.constant 3.200000e+01 : f32
    %174 = vector.broadcast %cst_53 : f32 to vector<16x1xf32>
    %175 = arith.divf %173, %174 : vector<16x1xf32>
    %176 = vector.broadcast %175 : vector<16x1xf32> to vector<16x32xf32>
    %177 = arith.subf %167, %176 : vector<16x32xf32>
    %178 = arith.mulf %177, %177 : vector<16x32xf32>
    %cst_54 = arith.constant dense<0.000000e+00> : vector<16xf32>
    %179 = vector.multi_reduction <add>, %178, %cst_54 [1] : vector<16x32xf32> to vector<16xf32>
    %180 = vector.shape_cast %179 : vector<16xf32> to vector<16x1xf32>
    %cst_55 = arith.constant 3.200000e+01 : f32
    %181 = vector.broadcast %cst_55 : f32 to vector<16x1xf32>
    %182 = arith.divf %180, %181 : vector<16x1xf32>
    %183 = vector.broadcast %175 : vector<16x1xf32> to vector<16x32xf32>
    %184 = arith.subf %167, %183 : vector<16x32xf32>
    %cst_56 = arith.constant 9.99999974E-6 : f32
    %185 = vector.broadcast %cst_56 : f32 to vector<16x1xf32>
    %186 = arith.addf %182, %185 : vector<16x1xf32>
    %187 = math.rsqrt %186 : vector<16x1xf32>
    %188 = vector.broadcast %187 : vector<16x1xf32> to vector<16x32xf32>
    %189 = arith.mulf %184, %188 : vector<16x32xf32>
    %190 = vector.shape_cast %169 : vector<32xf32> to vector<1x32xf32>
    %191 = vector.broadcast %190 : vector<1x32xf32> to vector<16x32xf32>
    %192 = arith.mulf %189, %191 : vector<16x32xf32>
    %193 = vector.shape_cast %171 : vector<32xf32> to vector<1x32xf32>
    %194 = vector.broadcast %193 : vector<1x32xf32> to vector<16x32xf32>
    %195 = arith.addf %192, %194 : vector<16x32xf32>
    %196 = arith.truncf %195 : vector<16x32xf32> to vector<16x32xbf16>
    %c32 = arith.constant 32 : index
    %c0_57 = arith.constant 0 : index
    %197 = vector.load %arg2[%c32, %c0_57] : memref<224x384xbf16, #tpu.memory_space<vmem>>, vector<32x96xbf16>
    %cst_58 = arith.constant dense<0.000000e+00> : vector<16x96xf32>
    %198 = tpu.matmul %196, %197, %cst_58 {dimension_numbers = #tpu.dot_dimension_numbers<[1], [0], [0], [1], [0, 0, 1, 1], [], []>} : vector<16x32xbf16>, vector<32x96xbf16>, vector<16x96xf32> -> vector<16x96xf32>
    %c10 = arith.constant 10 : index
    %c0_59 = arith.constant 0 : index
    %199 = vector.load %arg3[%c10, %c0_59] : memref<17x128xf32, #tpu.memory_space<vmem>>, vector<1x96xf32>
    %200 = vector.shape_cast %199 : vector<1x96xf32> to vector<96xf32>
    %201 = vector.shape_cast %200 : vector<96xf32> to vector<1x96xf32>
    %202 = vector.broadcast %201 : vector<1x96xf32> to vector<16x96xf32>
    %203 = arith.addf %198, %202 : vector<16x96xf32>
    %204 = vector.extract_strided_slice %203 {offsets = [0, 0], sizes = [16, 16], strides = [1, 1]} : vector<16x96xf32> to vector<16x16xf32>
    %205 = arith.truncf %204 : vector<16x16xf32> to vector<16x16xbf16>
    %206 = vector.extract_strided_slice %203 {offsets = [0, 32], sizes = [16, 16], strides = [1, 1]} : vector<16x96xf32> to vector<16x16xf32>
    %207 = arith.truncf %206 : vector<16x16xf32> to vector<16x16xbf16>
    %208 = vector.extract_strided_slice %203 {offsets = [0, 64], sizes = [16, 16], strides = [1, 1]} : vector<16x96xf32> to vector<16x16xf32>
    %209 = arith.truncf %208 : vector<16x16xf32> to vector<16x16xbf16>
    %cst_60 = arith.constant dense<0.000000e+00> : vector<16x16xf32>
    %210 = tpu.matmul %205, %207, %cst_60 {dimension_numbers = #tpu.dot_dimension_numbers<[1], [1], [0], [0], [0, 0, 1, 0], [], []>} : vector<16x16xbf16>, vector<16x16xbf16>, vector<16x16xf32> -> vector<16x16xf32>
    %cst_61 = arith.constant 2.500000e-01 : f32
    %211 = vector.broadcast %cst_61 : f32 to vector<16x16xf32>
    %212 = arith.mulf %210, %211 : vector<16x16xf32>
    %213 = arith.addf %212, %19 : vector<16x16xf32>
    %cst_62 = arith.constant dense<0xFF800000> : vector<16xf32>
    %214 = vector.multi_reduction <maximumf>, %213, %cst_62 [1] : vector<16x16xf32> to vector<16xf32>
    %215 = vector.shape_cast %214 : vector<16xf32> to vector<16x1xf32>
    %216 = vector.broadcast %215 : vector<16x1xf32> to vector<16x16xf32>
    %217 = arith.subf %213, %216 : vector<16x16xf32>
    %218 = math.exp %217 : vector<16x16xf32>
    %cst_63 = arith.constant dense<0.000000e+00> : vector<16xf32>
    %219 = vector.multi_reduction <add>, %218, %cst_63 [1] : vector<16x16xf32> to vector<16xf32>
    %220 = vector.shape_cast %219 : vector<16xf32> to vector<16x1xf32>
    %221 = tpu.reciprocal %220 {approx = true} : vector<16x1xf32> -> vector<16x1xf32>
    %222 = vector.broadcast %221 : vector<16x1xf32> to vector<16x16xf32>
    %223 = arith.mulf %218, %222 : vector<16x16xf32>
    %224 = arith.truncf %223 : vector<16x16xf32> to vector<16x16xbf16>
    %cst_64 = arith.constant dense<0.000000e+00> : vector<16x16xf32>
    %225 = tpu.matmul %224, %209, %cst_64 {dimension_numbers = #tpu.dot_dimension_numbers<[1], [0], [0], [1], [0, 0, 1, 1], [], []>} : vector<16x16xbf16>, vector<16x16xbf16>, vector<16x16xf32> -> vector<16x16xf32>
    %226 = vector.extract_strided_slice %203 {offsets = [0, 16], sizes = [16, 16], strides = [1, 1]} : vector<16x96xf32> to vector<16x16xf32>
    %227 = arith.truncf %226 : vector<16x16xf32> to vector<16x16xbf16>
    %228 = vector.extract_strided_slice %203 {offsets = [0, 48], sizes = [16, 16], strides = [1, 1]} : vector<16x96xf32> to vector<16x16xf32>
    %229 = arith.truncf %228 : vector<16x16xf32> to vector<16x16xbf16>
    %230 = vector.extract_strided_slice %203 {offsets = [0, 80], sizes = [16, 16], strides = [1, 1]} : vector<16x96xf32> to vector<16x16xf32>
    %231 = arith.truncf %230 : vector<16x16xf32> to vector<16x16xbf16>
    %cst_65 = arith.constant dense<0.000000e+00> : vector<16x16xf32>
    %232 = tpu.matmul %227, %229, %cst_65 {dimension_numbers = #tpu.dot_dimension_numbers<[1], [1], [0], [0], [0, 0, 1, 0], [], []>} : vector<16x16xbf16>, vector<16x16xbf16>, vector<16x16xf32> -> vector<16x16xf32>
    %cst_66 = arith.constant 2.500000e-01 : f32
    %233 = vector.broadcast %cst_66 : f32 to vector<16x16xf32>
    %234 = arith.mulf %232, %233 : vector<16x16xf32>
    %235 = arith.addf %234, %19 : vector<16x16xf32>
    %cst_67 = arith.constant dense<0xFF800000> : vector<16xf32>
    %236 = vector.multi_reduction <maximumf>, %235, %cst_67 [1] : vector<16x16xf32> to vector<16xf32>
    %237 = vector.shape_cast %236 : vector<16xf32> to vector<16x1xf32>
    %238 = vector.broadcast %237 : vector<16x1xf32> to vector<16x16xf32>
    %239 = arith.subf %235, %238 : vector<16x16xf32>
    %240 = math.exp %239 : vector<16x16xf32>
    %cst_68 = arith.constant dense<0.000000e+00> : vector<16xf32>
    %241 = vector.multi_reduction <add>, %240, %cst_68 [1] : vector<16x16xf32> to vector<16xf32>
    %242 = vector.shape_cast %241 : vector<16xf32> to vector<16x1xf32>
    %243 = tpu.reciprocal %242 {approx = true} : vector<16x1xf32> -> vector<16x1xf32>
    %244 = vector.broadcast %243 : vector<16x1xf32> to vector<16x16xf32>
    %245 = arith.mulf %240, %244 : vector<16x16xf32>
    %246 = arith.truncf %245 : vector<16x16xf32> to vector<16x16xbf16>
    %cst_69 = arith.constant dense<0.000000e+00> : vector<16x16xf32>
    %247 = tpu.matmul %246, %231, %cst_69 {dimension_numbers = #tpu.dot_dimension_numbers<[1], [0], [0], [1], [0, 0, 1, 1], [], []>} : vector<16x16xbf16>, vector<16x16xbf16>, vector<16x16xf32> -> vector<16x16xf32>
    %248 = tpu.concatenate %225, %247 in 1 : vector<16x16xf32>, vector<16x16xf32> -> vector<16x32xf32>
    %249 = arith.truncf %248 : vector<16x32xf32> to vector<16x32xbf16>
    %c32_70 = arith.constant 32 : index
    %c128_71 = arith.constant 128 : index
    %250 = vector.load %arg2[%c32_70, %c128_71] : memref<224x384xbf16, #tpu.memory_space<vmem>>, vector<32x32xbf16>
    %cst_72 = arith.constant dense<0.000000e+00> : vector<16x32xf32>
    %251 = tpu.matmul %249, %250, %cst_72 {dimension_numbers = #tpu.dot_dimension_numbers<[1], [0], [0], [1], [0, 0, 1, 1], [], []>} : vector<16x32xbf16>, vector<32x32xbf16>, vector<16x32xf32> -> vector<16x32xf32>
    %c11 = arith.constant 11 : index
    %c0_73 = arith.constant 0 : index
    %252 = vector.load %arg3[%c11, %c0_73] : memref<17x128xf32, #tpu.memory_space<vmem>>, vector<1x32xf32>
    %253 = vector.shape_cast %252 : vector<1x32xf32> to vector<32xf32>
    %254 = vector.shape_cast %253 : vector<32xf32> to vector<1x32xf32>
    %255 = vector.broadcast %254 : vector<1x32xf32> to vector<16x32xf32>
    %256 = arith.addf %251, %255 : vector<16x32xf32>
    %257 = arith.addf %167, %256 : vector<16x32xf32>
    %c12 = arith.constant 12 : index
    %c0_74 = arith.constant 0 : index
    %258 = vector.load %arg3[%c12, %c0_74] : memref<17x128xf32, #tpu.memory_space<vmem>>, vector<1x32xf32>
    %259 = vector.shape_cast %258 : vector<1x32xf32> to vector<32xf32>
    %c13 = arith.constant 13 : index
    %c0_75 = arith.constant 0 : index
    %260 = vector.load %arg3[%c13, %c0_75] : memref<17x128xf32, #tpu.memory_space<vmem>>, vector<1x32xf32>
    %261 = vector.shape_cast %260 : vector<1x32xf32> to vector<32xf32>
    %cst_76 = arith.constant dense<0.000000e+00> : vector<16xf32>
    %262 = vector.multi_reduction <add>, %257, %cst_76 [1] : vector<16x32xf32> to vector<16xf32>
    %263 = vector.shape_cast %262 : vector<16xf32> to vector<16x1xf32>
    %cst_77 = arith.constant 3.200000e+01 : f32
    %264 = vector.broadcast %cst_77 : f32 to vector<16x1xf32>
    %265 = arith.divf %263, %264 : vector<16x1xf32>
    %266 = vector.broadcast %265 : vector<16x1xf32> to vector<16x32xf32>
    %267 = arith.subf %257, %266 : vector<16x32xf32>
    %268 = arith.mulf %267, %267 : vector<16x32xf32>
    %cst_78 = arith.constant dense<0.000000e+00> : vector<16xf32>
    %269 = vector.multi_reduction <add>, %268, %cst_78 [1] : vector<16x32xf32> to vector<16xf32>
    %270 = vector.shape_cast %269 : vector<16xf32> to vector<16x1xf32>
    %cst_79 = arith.constant 3.200000e+01 : f32
    %271 = vector.broadcast %cst_79 : f32 to vector<16x1xf32>
    %272 = arith.divf %270, %271 : vector<16x1xf32>
    %273 = vector.broadcast %265 : vector<16x1xf32> to vector<16x32xf32>
    %274 = arith.subf %257, %273 : vector<16x32xf32>
    %cst_80 = arith.constant 9.99999974E-6 : f32
    %275 = vector.broadcast %cst_80 : f32 to vector<16x1xf32>
    %276 = arith.addf %272, %275 : vector<16x1xf32>
    %277 = math.rsqrt %276 : vector<16x1xf32>
    %278 = vector.broadcast %277 : vector<16x1xf32> to vector<16x32xf32>
    %279 = arith.mulf %274, %278 : vector<16x32xf32>
    %280 = vector.shape_cast %259 : vector<32xf32> to vector<1x32xf32>
    %281 = vector.broadcast %280 : vector<1x32xf32> to vector<16x32xf32>
    %282 = arith.mulf %279, %281 : vector<16x32xf32>
    %283 = vector.shape_cast %261 : vector<32xf32> to vector<1x32xf32>
    %284 = vector.broadcast %283 : vector<1x32xf32> to vector<16x32xf32>
    %285 = arith.addf %282, %284 : vector<16x32xf32>
    %286 = arith.truncf %285 : vector<16x32xf32> to vector<16x32xbf16>
    %c32_81 = arith.constant 32 : index
    %c256_82 = arith.constant 256 : index
    %287 = vector.load %arg2[%c32_81, %c256_82] : memref<224x384xbf16, #tpu.memory_space<vmem>>, vector<32x64xbf16>
    %cst_83 = arith.constant dense<0.000000e+00> : vector<16x64xf32>
    %288 = tpu.matmul %286, %287, %cst_83 {dimension_numbers = #tpu.dot_dimension_numbers<[1], [0], [0], [1], [0, 0, 1, 1], [], []>} : vector<16x32xbf16>, vector<32x64xbf16>, vector<16x64xf32> -> vector<16x64xf32>
    %c14 = arith.constant 14 : index
    %c0_84 = arith.constant 0 : index
    %289 = vector.load %arg3[%c14, %c0_84] : memref<17x128xf32, #tpu.memory_space<vmem>>, vector<1x64xf32>
    %290 = vector.shape_cast %289 : vector<1x64xf32> to vector<64xf32>
    %291 = vector.shape_cast %290 : vector<64xf32> to vector<1x64xf32>
    %292 = vector.broadcast %291 : vector<1x64xf32> to vector<16x64xf32>
    %293 = arith.addf %288, %292 : vector<16x64xf32>
    %294 = arith.mulf %293, %293 : vector<16x64xf32>
    %295 = arith.mulf %293, %294 : vector<16x64xf32>
    %cst_85 = arith.constant 4.471500e-02 : f32
    %296 = vector.broadcast %cst_85 : f32 to vector<16x64xf32>
    %297 = arith.mulf %296, %295 : vector<16x64xf32>
    %298 = arith.addf %293, %297 : vector<16x64xf32>
    %cst_86 = arith.constant 0.797884583 : f32
    %299 = vector.broadcast %cst_86 : f32 to vector<16x64xf32>
    %300 = arith.mulf %299, %298 : vector<16x64xf32>
    %301 = math.tanh %300 : vector<16x64xf32>
    %cst_87 = arith.constant 1.000000e+00 : f32
    %302 = vector.broadcast %cst_87 : f32 to vector<16x64xf32>
    %303 = arith.addf %302, %301 : vector<16x64xf32>
    %cst_88 = arith.constant 5.000000e-01 : f32
    %304 = vector.broadcast %cst_88 : f32 to vector<16x64xf32>
    %305 = arith.mulf %304, %303 : vector<16x64xf32>
    %306 = arith.mulf %293, %305 : vector<16x64xf32>
    %307 = arith.truncf %306 : vector<16x64xf32> to vector<16x64xbf16>
    %c128_89 = arith.constant 128 : index
    %c0_90 = arith.constant 0 : index
    %308 = vector.load %arg2[%c128_89, %c0_90] : memref<224x384xbf16, #tpu.memory_space<vmem>>, vector<64x32xbf16>
    %cst_91 = arith.constant dense<0.000000e+00> : vector<16x32xf32>
    %309 = tpu.matmul %307, %308, %cst_91 {dimension_numbers = #tpu.dot_dimension_numbers<[1], [0], [0], [1], [0, 0, 1, 1], [], []>} : vector<16x64xbf16>, vector<64x32xbf16>, vector<16x32xf32> -> vector<16x32xf32>
    %c15 = arith.constant 15 : index
    %c0_92 = arith.constant 0 : index
    %310 = vector.load %arg3[%c15, %c0_92] : memref<17x128xf32, #tpu.memory_space<vmem>>, vector<1x32xf32>
    %311 = vector.shape_cast %310 : vector<1x32xf32> to vector<32xf32>
    %312 = vector.shape_cast %311 : vector<32xf32> to vector<1x32xf32>
    %313 = vector.broadcast %312 : vector<1x32xf32> to vector<16x32xf32>
    %314 = arith.addf %309, %313 : vector<16x32xf32>
    %315 = arith.addf %257, %314 : vector<16x32xf32>
    %316 = vector.extract_strided_slice %315 {offsets = [0, 0], sizes = [1, 32], strides = [1, 1]} : vector<16x32xf32> to vector<1x32xf32>
    %317 = vector.extract_strided_slice %315 {offsets = [8, 0], sizes = [1, 32], strides = [1, 1]} : vector<16x32xf32> to vector<1x32xf32>
    %318 = tpu.concatenate %316, %317 in 0 : vector<1x32xf32>, vector<1x32xf32> -> vector<2x32xf32>
    %319 = arith.truncf %318 : vector<2x32xf32> to vector<2x32xbf16>
    %c192 = arith.constant 192 : index
    %c0_93 = arith.constant 0 : index
    %320 = vector.load %arg2[%c192, %c0_93] : memref<224x384xbf16, #tpu.memory_space<vmem>>, vector<32x128xbf16>
    %cst_94 = arith.constant dense<0.000000e+00> : vector<2x128xf32>
    %321 = tpu.matmul %319, %320, %cst_94 {dimension_numbers = #tpu.dot_dimension_numbers<[1], [0], [0], [1], [0, 0, 1, 1], [], []>} : vector<2x32xbf16>, vector<32x128xbf16>, vector<2x128xf32> -> vector<2x128xf32>
    %c16 = arith.constant 16 : index
    %c0_95 = arith.constant 0 : index
    %322 = vector.load %arg3[%c16, %c0_95] : memref<17x128xf32, #tpu.memory_space<vmem>>, vector<1x128xf32>
    %323 = vector.shape_cast %322 : vector<1x128xf32> to vector<128xf32>
    %324 = vector.shape_cast %323 : vector<128xf32> to vector<1x128xf32>
    %325 = vector.broadcast %324 : vector<1x128xf32> to vector<2x128xf32>
    %326 = arith.addf %321, %325 : vector<2x128xf32>
    %c0_96 = arith.constant 0 : index
    %c0_97 = arith.constant 0 : index
    %327 = vector.load %arg4[%c0_96, %c0_97] : memref<2x128xf32, #tpu.memory_space<vmem>>, vector<2x128xf32>
    tpu.vector_store %arg4[%c0_96, %c0_97], %326 {strides = array<i32>} : memref<2x128xf32, #tpu.memory_space<vmem>>, vector<2x128xf32>,
    return
  }
}

</mosaic_0001>

<llo_original>
// kernel: tpu_custom_call.1
$region0: #{tpu_custom_call.1}
  #allocation0 [shape = 'u32[]', space=smem, size = 0x4, offset = 0x4, fixed_abs, tag = 'smem constant byte address 0x4 - core index']
  #allocation1 [shape = 'u32[144,128]{1,0:T(1,128)}', space=vmem, size = 0x12000, scoped, tag = 'internal scratch']
  %s0 = inlined_call_operand.vmem [shape: s32[16,1], index: 0, kind: input, shape index: {}]
  %s1 = inlined_call_operand.vmem [shape: f32[144,32], index: 1, kind: input, shape index: {}]
  %s2 = inlined_call_operand.hbm [shape: bf16[224,384], index: 2, kind: input, shape index: {}]
  %s3 = inlined_call_operand.vmem [shape: f32[17,128], index: 3, kind: input, shape index: {}]
  %s4 = inlined_call_operand.hbm [shape: f32[2,128], index: 4, kind: output, shape index: {}]
  %s5 = sld [smem:[#allocation0]]
  $region30: #{tpu_custom_call.1} parent=0
    _
  %s7 = ssub.s32 1, %s5
  %s8 = scalar_select 0, %s7, %s5
  $region1: #{tpu_custom_call.1} parent=0
    #allocation2 [shape = 'u8[172032]{0}', space=vmem, size = 0x2a000, scoped, tag = 'input window, operand 2, single buffered']
    #allocation3 [shape = 's32[1]{0}', space=sflag, size = 0x4, scoped, tag = 'scoped memory for tpu_custom_call.1']
    #allocation4 [shape = 's32[1]{0}', space=sflag, size = 0x4, scoped, tag = 'scoped memory for tpu_custom_call.1']
    #allocation5 [shape = 'u8[1024]{0}', space=vmem, size = 0x400, scoped, tag = 'output window, operand 0, single buffered']
    %9 = vsyncpa [#allocation3], 0
    %10 = vsyncpa [#allocation4], 0
    // Predicated region
    $region2: #{tpu_custom_call.1} parent=1 // pred_check
      _
    $region3: #{tpu_custom_call.1} parent=1 // pred_check_branch
      %12 = sbr.rel (0) target = $region5
    $region4: #{tpu_custom_call.1} parent=1 // pred_region
      _
    $region5: #{tpu_custom_call.1} parent=1 // pred_fallthru
      _
    // Predicated region
    $region6: #{tpu_custom_call.1} parent=1 // pred_check
      _
    $region7: #{tpu_custom_call.1} parent=1 // pred_check_branch
      %14 = sbr.rel (0) target = $region9
    $region8: #{tpu_custom_call.1} parent=1 // pred_region
      _
    $region9: #{tpu_custom_call.1} parent=1 // pred_fallthru
      _
    // Predicated region
    $region10: #{tpu_custom_call.1} parent=1 // pred_check
      _
    $region11: #{tpu_custom_call.1} parent=1 // pred_check_branch
      %16 = sbr.rel (0) target = $region13
    $region12: #{tpu_custom_call.1} parent=1 // pred_region
      %s18 = ssub.s32 5376, 5376
      %19 = vsyncadd [#allocation3], %s18
      %s20 = sshll.u32 [#allocation2], 4
      %s21 = int_to_ptr.vmem [resolvable:$true] %s20
      %26 = dma.hbm_to_vmem [thread:$0]  %s2, 5376, %s21, [#allocation3], 192, 192, 12
    $region13: #{tpu_custom_call.1} parent=1 // pred_fallthru
      _
    // Predicated region
    $region14: #{tpu_custom_call.1} parent=1 // pred_check
      _
    $region15: #{tpu_custom_call.1} parent=1 // pred_check_branch
      %28 = sbr.rel (0) target = $region17
    $region16: #{tpu_custom_call.1} parent=1 // pred_region
      _
    $region17: #{tpu_custom_call.1} parent=1 // pred_fallthru
      _
    // Predicated region
    $region18: #{tpu_custom_call.1} parent=1 // pred_check
      _
    $region19: #{tpu_custom_call.1} parent=1 // pred_check_branch
      %30 = sbr.rel (0) target = $region21
    $region20: #{tpu_custom_call.1} parent=1 // pred_region
      %31 = dma.done [#allocation3], 5376
    $region21: #{tpu_custom_call.1} parent=1 // pred_fallthru
      _
    %v33 = vlaneseq
    %v34 = vand.u32 %v33, 127
    %v35 = vld [vmem:[%s0] sm:$0xff]
    %v36 = vld [vmem:[%s0 + $0x8] sm:$0xff]
    %37 = vset.pattern.permute.xlu0 0
    %38 = vperm.xlu0 %37, %v35
    %v39 = vpop.permute.xlu0 %38
    %40 = vset.pattern.permute.xlu0 0
    %41 = vperm.xlu0 %40, %v36
    %v42 = vpop.permute.xlu0 %41
    %vm43 = vcmp.eq.s32.totalorder %v34, %v39
    %vm44 = vcmp.eq.s32.totalorder %v34, %v42
    %v45 = vsel %vm43, 1, 0
    %v46 = vsel %vm44, 1, 0
    %v47 = vcvt.s32.f32 %v45
    %v48 = vcvt.s32.f32 %v46
    %v49 = vld [vmem:[%s1] sm:$0xff]
    %v50 = vld [vmem:[%s1 + $0x8] sm:$0xff]
    %v51 = vld [vmem:[%s1 + $0x10] sm:$0xff]
    %v52 = vld [vmem:[%s1 + $0x18] sm:$0xff]
    %v53 = vld [vmem:[%s1 + $0x20] sm:$0xff]
    %v54 = vld [vmem:[%s1 + $0x28] sm:$0xff]
    %v55 = vld [vmem:[%s1 + $0x30] sm:$0xff]
    %v56 = vld [vmem:[%s1 + $0x38] sm:$0xff]
    %v57 = vld [vmem:[%s1 + $0x40] sm:$0xff]
    %v58 = vld [vmem:[%s1 + $0x48] sm:$0xff]
    %v59 = vld [vmem:[%s1 + $0x50] sm:$0xff]
    %v60 = vld [vmem:[%s1 + $0x58] sm:$0xff]
    %v61 = vld [vmem:[%s1 + $0x60] sm:$0xff]
    %v62 = vld [vmem:[%s1 + $0x68] sm:$0xff]
    %v63 = vld [vmem:[%s1 + $0x70] sm:$0xff]
    %v64 = vld [vmem:[%s1 + $0x78] sm:$0xff]
    %v65 = vld [vmem:[%s1 + $0x80] sm:$0xff]
    %v66 = vld [vmem:[%s1 + $0x88] sm:$0xff]
    %67 = vmatprep.subr.mxu0 0.0
    %68 = vmatpush1.msra.mxu0 %v64
    %69 = vmatprep.subr.mxu0 0.0
    %70 = vmatpush1.msra.mxu0 %v63
    %71 = vmatprep.subr.mxu0 0.0
    %72 = vmatpush1.msra.mxu0 %v62
    %73 = vmatprep.subr.mxu0 0.0
    %74 = vmatpush1.msra.mxu0 %v61
    %75 = vmatprep.subr.mxu0 0.0
    %76 = vmatpush1.msra.mxu0 %v60
    %77 = vmatprep.subr.mxu0 0.0
    %78 = vmatpush1.msra.mxu0 %v59
    %79 = vmatprep.subr.mxu0 0.0
    %80 = vmatpush1.msra.mxu0 %v58
    %81 = vmatprep.subr.mxu0 0.0
    %82 = vmatpush1.msra.mxu0 %v57
    %83 = vmatprep.subr.mxu0 0.0
    %84 = vmatpush1.msra.mxu0 %v56
    %85 = vmatprep.subr.mxu0 0.0
    %86 = vmatpush1.msra.mxu0 %v55
    %87 = vmatprep.subr.mxu0 0.0
    %88 = vmatpush1.msra.mxu0 %v54
    %89 = vmatprep.subr.mxu0 0.0
    %90 = vmatpush1.msra.mxu0 %v53
    %91 = vmatprep.subr.mxu0 0.0
    %92 = vmatpush1.msra.mxu0 %v52
    %93 = vmatprep.subr.mxu0 0.0
    %94 = vmatpush1.msra.mxu0 %v51
    %95 = vmatprep.subr.mxu0 0.0
    %96 = vmatpush1.msra.mxu0 %v50
    %97 = vmatprep.subr.mxu0 0.0
    %98 = vmatpush1.msra.mxu0 %v49
    %99 = vmatprep.subr.mxu0 0.0
    %100 = vmatpush2.msra.mxu0 0.0
    %101 = vmatprep.subr.mxu0 0.0
    %102 = vmatpush2.msra.mxu0 0.0
    %103 = vmatprep.subr.mxu0 0.0
    %104 = vmatpush2.msra.mxu0 0.0
    %105 = vmatprep.subr.mxu0 0.0
    %106 = vmatpush2.msra.mxu0 0.0
    %107 = vmatprep.subr.mxu0 0.0
    %108 = vmatpush2.msra.mxu0 0.0
    %109 = vmatprep.subr.mxu0 0.0
    %110 = vmatpush2.msra.mxu0 0.0
    %111 = vmatprep.subr.mxu0 0.0
    %112 = vmatpush2.msra.mxu0 0.0
    %113 = vmatprep.subr.mxu0 0.0
    %114 = vmatpush2.msra.mxu0 0.0
    %115 = vmatprep.subr.mxu0 0.0
    %116 = vmatpush2.msra.mxu0 0.0
    %117 = vmatprep.subr.mxu0 0.0
    %118 = vmatpush2.msra.mxu0 0.0
    %119 = vmatprep.subr.mxu0 0.0
    %120 = vmatpush2.msra.mxu0 0.0
    %121 = vmatprep.subr.mxu0 0.0
    %122 = vmatpush2.msra.mxu0 0.0
    %123 = vmatprep.subr.mxu0 0.0
    %124 = vmatpush2.msra.mxu0 0.0
    %125 = vmatprep.subr.mxu0 0.0
    %126 = vmatpush2.msra.mxu0 0.0
    %127 = vmatprep.subr.mxu0 0.0
    %128 = vmatpush2.msra.mxu0 0.0
    %129 = vmatprep.subr.mxu0 0.0
    %130 = vmatpush2.msra.mxu0 0.0
    %131 = vmatprep.mubr.f32.mxu0 0.0
    %132 = vmatmul.mubr.f32.gmra.mxu0 %v47
    %v133 = vpop.f32.mrf.mxu0
    %v134 = vadd.f32 %v65, %v133
    %v135 = vpop.f32.mrf.mxu0
    %136 = vmatprep.mubr.f32.mxu0 0.0
    %137 = vmatmul.mubr.f32.gmra.mxu0 %v48
    %v138 = vpop.f32.mrf.mxu0
    %v139 = vadd.f32 %v66, %v138
    %v140 = vpop.f32.mrf.mxu0
    %141 = vdwg.mxu0
    %v142 = vlaneseq
    %v143 = vshrl.u32 %v142, 7
    %v144 = vadd.s32 %v143, 8
    %v145 = vshra.s32 %v143, 3
    %v146 = vshra.s32 %v144, 3
    %v147 = vshra.s32 %v34, 3
    %vm148 = vcmp.eq.s32.totalorder %v145, %v147
    %vm149 = vcmp.eq.s32.totalorder %v146, %v147
    %v150 = vsel %vm148, 0.0, -1e+30
    %v151 = vsel %vm149, 0.0, -1e+30
    %v152 = vld [vmem:[%s3] sm:$0x1]
    %v153 = vld [vmem:[%s3 + $0x1] sm:$0x1]
    %vm154 = vcmask 261120
    %v155 = vsel %vm154, %v134, 0.0
    %156 = vadd.xlane.f32.xlu0 %v155
    %v157 = vpop.xlane.xlu0 %156
    %v158 = vsel %vm154, %v139, 0.0
    %159 = vadd.xlane.f32.xlu0 %v158
    %v160 = vpop.xlane.xlu0 %159
    %v161 = vrcp.pop 32.0
    %v162 = vmul.f32 %v157, %v161
    %v163 = vmul.f32 %v160, %v161
    %v164 = vsub.f32 %v134, %v162
    %v165 = vsub.f32 %v139, %v163
    %v166 = vmul.f32 %v164, %v164
    %v167 = vmul.f32 %v165, %v165
    %v168 = vsel %vm154, %v166, 0.0
    %169 = vadd.xlane.f32.xlu0 %v168
    %v170 = vpop.xlane.xlu0 %169
    %v171 = vsel %vm154, %v167, 0.0
    %172 = vadd.xlane.f32.xlu0 %v171
    %v173 = vpop.xlane.xlu0 %172
    %v174 = vmul.f32 %v170, %v161
    %v175 = vmul.f32 %v173, %v161
    %v176 = vadd.f32 %v174, 1e-05
    %v177 = vadd.f32 %v175, 1e-05
    %v178 = vrsqrt.pop %v176
    %v179 = vrsqrt.pop %v177
    %v180 = vmul.f32 %v164, %v178
    %v181 = vmul.f32 %v165, %v179
    %v182 = vlaneseq
    %v183 = vshrl.u32 %v182, 7
    %v184 = vsub.s32 0, %v183
    %v185 = vrot.slane %v152, %v184
    %v186 = vmul.f32 %v180, %v185
    %v187 = vmul.f32 %v181, %v185
    %v188 = vlaneseq
    %v189 = vshrl.u32 %v188, 7
    %v190 = vsub.s32 0, %v189
    %v191 = vrot.slane %v153, %v190
    %v192 = vadd.f32 %v186, %v191
    %v193 = vadd.f32 %v187, %v191
    %v194 = vpack.c.bf16 %v193, %v192
    %v195 = vld [vmem:[#allocation2] sm:$0xf]
    %v196 = vld [vmem:[#allocation2 + $0xc] sm:$0xf]
    %v197 = vld [vmem:[#allocation2 + $0x18] sm:$0xf]
    %v198 = vld [vmem:[#allocation2 + $0x24] sm:$0xf]
    %v199 = vld [vmem:[%s3 + $0x2] sm:$0x1]
    %v200 = vlaneseq
    %v201 = vshrl.u32 %v200, 7
    %v202 = vsub.s32 0, %v201
    %v203 = vrot.slane %v199, %v202
    %v208 = vunpack.c.l.b16 %v195
    %v209 = vunpack.c.l.b16 %v196
    %v210 = vunpack.c.l.b16 %v197
    %v211 = vunpack.c.l.b16 %v198
    %v212 = vpack.c.b16 %v209, %v208
    %v213 = vpack.c.b16 %v211, %v210
    %v217 = vsel %vm154, %v194, 0
    %219 = vmatprep.subr.bf16.mxu0 0
    %220 = vmatpush1.bf16.msra.mxu0 0
    %221 = vmatprep.subr.bf16.mxu0 0
    %222 = vmatpush1.bf16.msra.mxu0 0
    %223 = vmatprep.subr.bf16.mxu0 0
    %224 = vmatpush1.bf16.msra.mxu0 0
    %225 = vmatprep.subr.bf16.mxu0 0
    %226 = vmatpush1.bf16.msra.mxu0 0
    %227 = vmatprep.subr.bf16.mxu0 0
    %228 = vmatpush1.bf16.msra.mxu0 0
    %229 = vmatprep.subr.bf16.mxu0 0
    %230 = vmatpush1.bf16.msra.mxu0 0
    %231 = vmatprep.subr.bf16.mxu0 0
    %232 = vmatpush1.bf16.msra.mxu0 %v213
    %233 = vmatprep.subr.bf16.mxu0 0
    %234 = vmatpush1.bf16.msra.mxu0 %v212
    %235 = vmatprep.subr.bf16.mxu0 0
    %236 = vmatpush2.bf16.msra.mxu0 0
    %237 = vmatprep.subr.bf16.mxu0 0
    %238 = vmatpush2.bf16.msra.mxu0 0
    %239 = vmatprep.subr.bf16.mxu0 0
    %240 = vmatpush2.bf16.msra.mxu0 0
    %241 = vmatprep.subr.bf16.mxu0 0
    %242 = vmatpush2.bf16.msra.mxu0 0
    %243 = vmatprep.subr.bf16.mxu0 0
    %244 = vmatpush2.bf16.msra.mxu0 0
    %245 = vmatprep.subr.bf16.mxu0 0
    %246 = vmatpush2.bf16.msra.mxu0 0
    %247 = vmatprep.subr.bf16.mxu0 0
    %248 = vmatpush2.bf16.msra.mxu0 0
    %249 = vmatprep.subr.bf16.mxu0 0
    %250 = vmatpush2.bf16.msra.mxu0 0
    %251 = vmatprep.mubr.bf16.mxu0 0
    %252 = vmatmul.mubr.bf16.gmra.mxu0 %v217
    %v253 = vpop.f32.mrf.mxu0
    %v254 = vadd.f32 %v203, %v253
    %v255 = vpop.f32.mrf.mxu0
    %v256 = vpop.f32.mrf.mxu0
    %v257 = vadd.f32 %v203, %v256
    %v258 = vpop.f32.mrf.mxu0
    %259 = vdwg.mxu0
    %v260 = vpack.c.bf16 %v257, %v254
    %262 = vrot.lane.b32.xlu0 %v260, 96
    %v263 = vpop.permute.xlu0 %262
    %vm264 = vcmask 130048
    %v266 = vsel %vm264, %v260, 0
    %v269 = vsel %vm264, %v263, 0
    %271 = vmatprep.subr.bf16.mxu0 0
    %272 = vmatpush1.bf16.xpose.msra.mxu0 0
    %273 = vmatprep.subr.bf16.mxu0 0
    %274 = vmatpush1.bf16.xpose.msra.mxu0 0
    %275 = vmatprep.subr.bf16.mxu0 0
    %276 = vmatpush1.bf16.xpose.msra.mxu0 0
    %277 = vmatprep.subr.bf16.mxu0 0
    %278 = vmatpush1.bf16.xpose.msra.mxu0 0
    %279 = vmatprep.subr.bf16.mxu0 0
    %280 = vmatpush1.bf16.xpose.msra.mxu0 0
    %281 = vmatprep.subr.bf16.mxu0 0
    %282 = vmatpush1.bf16.xpose.msra.mxu0 0
    %283 = vmatprep.subr.bf16.mxu0 0
    %284 = vmatpush1.bf16.xpose.msra.mxu0 0
    %285 = vmatprep.subr.bf16.mxu0 0
    %286 = vmatpush1.bf16.xpose.msra.mxu0 %v269
    %287 = vmatprep.subr.bf16.mxu0 0
    %288 = vmatpush2.bf16.xpose.msra.mxu0 0
    %289 = vmatprep.subr.bf16.mxu0 0
    %290 = vmatpush2.bf16.xpose.msra.mxu0 0
    %291 = vmatprep.subr.bf16.mxu0 0
    %292 = vmatpush2.bf16.xpose.msra.mxu0 0
    %293 = vmatprep.subr.bf16.mxu0 0
    %294 = vmatpush2.bf16.xpose.msra.mxu0 0
    %295 = vmatprep.subr.bf16.mxu0 0
    %296 = vmatpush2.bf16.xpose.msra.mxu0 0
    %297 = vmatprep.subr.bf16.mxu0 0
    %298 = vmatpush2.bf16.xpose.msra.mxu0 0
    %299 = vmatprep.subr.bf16.mxu0 0
    %300 = vmatpush2.bf16.xpose.msra.mxu0 0
    %301 = vmatprep.subr.bf16.mxu0 0
    %302 = vmatpush2.bf16.xpose.msra.mxu0 0
    %303 = vmatprep.mubr.bf16.mxu0 0
    %304 = vmatmul.mubr.bf16.gmra.mxu0 %v266
    %v305 = vpop.f32.mrf.mxu0
    %v306 = vadd.f32 0.0, %v305
    %v307 = vpop.f32.mrf.mxu0
    %v308 = vpop.f32.mrf.mxu0
    %v309 = vadd.f32 0.0, %v308
    %v310 = vpop.f32.mrf.mxu0
    %311 = vdwg.mxu0
    %v312 = vmul.f32 %v306, 0.25
    %v313 = vmul.f32 %v309, 0.25
    %v314 = vadd.f32 %v312, %v150
    %v315 = vadd.f32 %v313, %v151
    %v316 = vsel %vm264, %v314, -inf
    %317 = vmax.xlane.f32.xlu0 %v316
    %v318 = vpop.xlane.xlu0 %317
    %v319 = vsel %vm264, %v315, -inf
    %320 = vmax.xlane.f32.xlu0 %v319
    %v321 = vpop.xlane.xlu0 %320
    %v322 = vsub.f32 %v314, %v318
    %v323 = vsub.f32 %v315, %v321
    %v324 = vmul.f32 %v322, 1.442695
    %v325 = vpow.pop %v324
    %v326 = vmul.f32 %v323, 1.442695
    %v327 = vpow.pop %v326
    %v328 = vsel %vm264, %v325, 0.0
    %329 = vadd.xlane.f32.xlu0 %v328
    %v330 = vpop.xlane.xlu0 %329
    %v331 = vsel %vm264, %v327, 0.0
    %332 = vadd.xlane.f32.xlu0 %v331
    %v333 = vpop.xlane.xlu0 %332
    %v334 = vrcp.pop %v330
    %v335 = vrcp.pop %v333
    %v336 = vmul.f32 %v325, %v334
    %v337 = vmul.f32 %v327, %v335
    %v338 = vpack.c.bf16 %v337, %v336
    %339 = vrot.lane.b32.xlu0 %v260, 64
    %v340 = vpop.permute.xlu0 %339
    %v343 = vsel %vm264, %v338, 0
    %345 = vmatprep.subr.bf16.mxu0 0
    %346 = vmatpush1.bf16.msra.mxu0 0
    %347 = vmatprep.subr.bf16.mxu0 0
    %348 = vmatpush1.bf16.msra.mxu0 0
    %349 = vmatprep.subr.bf16.mxu0 0
    %350 = vmatpush1.bf16.msra.mxu0 0
    %351 = vmatprep.subr.bf16.mxu0 0
    %352 = vmatpush1.bf16.msra.mxu0 0
    %353 = vmatprep.subr.bf16.mxu0 0
    %354 = vmatpush1.bf16.msra.mxu0 0
    %355 = vmatprep.subr.bf16.mxu0 0
    %356 = vmatpush1.bf16.msra.mxu0 0
    %357 = vmatprep.subr.bf16.mxu0 0
    %358 = vmatpush1.bf16.msra.mxu0 0
    %359 = vmatprep.subr.bf16.mxu0 0
    %360 = vmatpush1.bf16.msra.mxu0 %v340
    %361 = vmatprep.subr.bf16.mxu0 0
    %362 = vmatpush2.bf16.msra.mxu0 0
    %363 = vmatprep.subr.bf16.mxu0 0
    %364 = vmatpush2.bf16.msra.mxu0 0
    %365 = vmatprep.subr.bf16.mxu0 0
    %366 = vmatpush2.bf16.msra.mxu0 0
    %367 = vmatprep.subr.bf16.mxu0 0
    %368 = vmatpush2.bf16.msra.mxu0 0
    %369 = vmatprep.subr.bf16.mxu0 0
    %370 = vmatpush2.bf16.msra.mxu0 0
    %371 = vmatprep.subr.bf16.mxu0 0
    %372 = vmatpush2.bf16.msra.mxu0 0
    %373 = vmatprep.subr.bf16.mxu0 0
    %374 = vmatpush2.bf16.msra.mxu0 0
    %375 = vmatprep.subr.bf16.mxu0 0
    %376 = vmatpush2.bf16.msra.mxu0 0
    %377 = vmatprep.mubr.bf16.mxu0 0
    %378 = vmatmul.mubr.bf16.gmra.mxu0 %v343
    %v379 = vpop.f32.mrf.mxu0
    %v380 = vadd.f32 0.0, %v379
    %v381 = vpop.f32.mrf.mxu0
    %v382 = vpop.f32.mrf.mxu0
    %v383 = vadd.f32 0.0, %v382
    %v384 = vpop.f32.mrf.mxu0
    %385 = vdwg.mxu0
    %386 = vrot.lane.b32.xlu0 %v260, 112
    %v387 = vpop.permute.xlu0 %386
    %388 = vrot.lane.b32.xlu0 %v260, 80
    %v389 = vpop.permute.xlu0 %388
    %v391 = vsel %vm264, %v387, 0
    %v394 = vsel %vm264, %v389, 0
    %396 = vmatprep.subr.bf16.mxu0 0
    %397 = vmatpush1.bf16.xpose.msra.mxu0 0
    %398 = vmatprep.subr.bf16.mxu0 0
    %399 = vmatpush1.bf16.xpose.msra.mxu0 0
    %400 = vmatprep.subr.bf16.mxu0 0
    %401 = vmatpush1.bf16.xpose.msra.mxu0 0
    %402 = vmatprep.subr.bf16.mxu0 0
    %403 = vmatpush1.bf16.xpose.msra.mxu0 0
    %404 = vmatprep.subr.bf16.mxu0 0
    %405 = vmatpush1.bf16.xpose.msra.mxu0 0
    %406 = vmatprep.subr.bf16.mxu0 0
    %407 = vmatpush1.bf16.xpose.msra.mxu0 0
    %408 = vmatprep.subr.bf16.mxu0 0
    %409 = vmatpush1.bf16.xpose.msra.mxu0 0
    %410 = vmatprep.subr.bf16.mxu0 0
    %411 = vmatpush1.bf16.xpose.msra.mxu0 %v394
    %412 = vmatprep.subr.bf16.mxu0 0
    %413 = vmatpush2.bf16.xpose.msra.mxu0 0
    %414 = vmatprep.subr.bf16.mxu0 0
    %415 = vmatpush2.bf16.xpose.msra.mxu0 0
    %416 = vmatprep.subr.bf16.mxu0 0
    %417 = vmatpush2.bf16.xpose.msra.mxu0 0
    %418 = vmatprep.subr.bf16.mxu0 0
    %419 = vmatpush2.bf16.xpose.msra.mxu0 0
    %420 = vmatprep.subr.bf16.mxu0 0
    %421 = vmatpush2.bf16.xpose.msra.mxu0 0
    %422 = vmatprep.subr.bf16.mxu0 0
    %423 = vmatpush2.bf16.xpose.msra.mxu0 0
    %424 = vmatprep.subr.bf16.mxu0 0
    %425 = vmatpush2.bf16.xpose.msra.mxu0 0
    %426 = vmatprep.subr.bf16.mxu0 0
    %427 = vmatpush2.bf16.xpose.msra.mxu0 0
    %428 = vmatprep.mubr.bf16.mxu0 0
    %429 = vmatmul.mubr.bf16.gmra.mxu0 %v391
    %v430 = vpop.f32.mrf.mxu0
    %v431 = vadd.f32 0.0, %v430
    %v432 = vpop.f32.mrf.mxu0
    %v433 = vpop.f32.mrf.mxu0
    %v434 = vadd.f32 0.0, %v433
    %v435 = vpop.f32.mrf.mxu0
    %436 = vdwg.mxu0
    %v437 = vmul.f32 %v431, 0.25
    %v438 = vmul.f32 %v434, 0.25
    %v439 = vadd.f32 %v437, %v150
    %v440 = vadd.f32 %v438, %v151
    %v441 = vsel %vm264, %v439, -inf
    %442 = vmax.xlane.f32.xlu0 %v441
    %v443 = vpop.xlane.xlu0 %442
    %v444 = vsel %vm264, %v440, -inf
    %445 = vmax.xlane.f32.xlu0 %v444
    %v446 = vpop.xlane.xlu0 %445
    %v447 = vsub.f32 %v439, %v443
    %v448 = vsub.f32 %v440, %v446
    %v449 = vmul.f32 %v447, 1.442695
    %v450 = vpow.pop %v449
    %v451 = vmul.f32 %v448, 1.442695
    %v452 = vpow.pop %v451
    %v453 = vsel %vm264, %v450, 0.0
    %454 = vadd.xlane.f32.xlu0 %v453
    %v455 = vpop.xlane.xlu0 %454
    %v456 = vsel %vm264, %v452, 0.0
    %457 = vadd.xlane.f32.xlu0 %v456
    %v458 = vpop.xlane.xlu0 %457
    %v459 = vrcp.pop %v455
    %v460 = vrcp.pop %v458
    %v461 = vmul.f32 %v450, %v459
    %v462 = vmul.f32 %v452, %v460
    %v463 = vpack.c.bf16 %v462, %v461
    %464 = vrot.lane.b32.xlu0 %v260, 48
    %v465 = vpop.permute.xlu0 %464
    %v468 = vsel %vm264, %v463, 0
    %470 = vmatprep.subr.bf16.mxu0 0
    %471 = vmatpush1.bf16.msra.mxu0 0
    %472 = vmatprep.subr.bf16.mxu0 0
    %473 = vmatpush1.bf16.msra.mxu0 0
    %474 = vmatprep.subr.bf16.mxu0 0
    %475 = vmatpush1.bf16.msra.mxu0 0
    %476 = vmatprep.subr.bf16.mxu0 0
    %477 = vmatpush1.bf16.msra.mxu0 0
    %478 = vmatprep.subr.bf16.mxu0 0
    %479 = vmatpush1.bf16.msra.mxu0 0
    %480 = vmatprep.subr.bf16.mxu0 0
    %481 = vmatpush1.bf16.msra.mxu0 0
    %482 = vmatprep.subr.bf16.mxu0 0
    %483 = vmatpush1.bf16.msra.mxu0 0
    %484 = vmatprep.subr.bf16.mxu0 0
    %485 = vmatpush1.bf16.msra.mxu0 %v465
    %486 = vmatprep.subr.bf16.mxu0 0
    %487 = vmatpush2.bf16.msra.mxu0 0
    %488 = vmatprep.subr.bf16.mxu0 0
    %489 = vmatpush2.bf16.msra.mxu0 0
    %490 = vmatprep.subr.bf16.mxu0 0
    %491 = vmatpush2.bf16.msra.mxu0 0
    %492 = vmatprep.subr.bf16.mxu0 0
    %493 = vmatpush2.bf16.msra.mxu0 0
    %494 = vmatprep.subr.bf16.mxu0 0
    %495 = vmatpush2.bf16.msra.mxu0 0
    %496 = vmatprep.subr.bf16.mxu0 0
    %497 = vmatpush2.bf16.msra.mxu0 0
    %498 = vmatprep.subr.bf16.mxu0 0
    %499 = vmatpush2.bf16.msra.mxu0 0
    %500 = vmatprep.subr.bf16.mxu0 0
    %501 = vmatpush2.bf16.msra.mxu0 0
    %502 = vmatprep.mubr.bf16.mxu0 0
    %503 = vmatmul.mubr.bf16.gmra.mxu0 %v468
    %v504 = vpop.f32.mrf.mxu0
    %v505 = vadd.f32 0.0, %v504
    %v506 = vpop.f32.mrf.mxu0
    %v507 = vpop.f32.mrf.mxu0
    %v508 = vadd.f32 0.0, %v507
    %v509 = vpop.f32.mrf.mxu0
    %510 = vdwg.mxu0
    %513 = vrot.lane.b32.xlu0 %v505, 16
    %v514 = vpop.permute.xlu0 %513
    %515 = vrot.lane.b32.xlu0 %v508, 16
    %v516 = vpop.permute.xlu0 %515
    %v519 = vsel %vm264, %v380, %v514
    %v520 = vsel %vm264, %v383, %v516
    %v521 = vpack.c.bf16 %v520, %v519
    %v522 = vld [vmem:[#allocation2 + $0x4] sm:$0xf]
    %v523 = vld [vmem:[#allocation2 + $0x10] sm:$0xf]
    %v524 = vld [vmem:[#allocation2 + $0x1c] sm:$0xf]
    %v525 = vld [vmem:[#allocation2 + $0x28] sm:$0xf]
    %v526 = vld [vmem:[%s3 + $0x3] sm:$0x1]
    %v527 = vlaneseq
    %v528 = vshrl.u32 %v527, 7
    %v529 = vsub.s32 0, %v528
    %v530 = vrot.slane %v526, %v529
    %v535 = vunpack.c.l.b16 %v522
    %v536 = vunpack.c.l.b16 %v523
    %v537 = vunpack.c.l.b16 %v524
    %v538 = vunpack.c.l.b16 %v525
    %v539 = vpack.c.b16 %v536, %v535
    %v540 = vpack.c.b16 %v538, %v537
    %v544 = vsel %vm154, %v521, 0
    %546 = vmatprep.subr.bf16.mxu0 0
    %547 = vmatpush1.bf16.msra.mxu0 0
    %548 = vmatprep.subr.bf16.mxu0 0
    %549 = vmatpush1.bf16.msra.mxu0 0
    %550 = vmatprep.subr.bf16.mxu0 0
    %551 = vmatpush1.bf16.msra.mxu0 0
    %552 = vmatprep.subr.bf16.mxu0 0
    %553 = vmatpush1.bf16.msra.mxu0 0
    %554 = vmatprep.subr.bf16.mxu0 0
    %555 = vmatpush1.bf16.msra.mxu0 0
    %556 = vmatprep.subr.bf16.mxu0 0
    %557 = vmatpush1.bf16.msra.mxu0 0
    %558 = vmatprep.subr.bf16.mxu0 0
    %559 = vmatpush1.bf16.msra.mxu0 %v540
    %560 = vmatprep.subr.bf16.mxu0 0
    %561 = vmatpush1.bf16.msra.mxu0 %v539
    %562 = vmatprep.subr.bf16.mxu0 0
    %563 = vmatpush2.bf16.msra.mxu0 0
    %564 = vmatprep.subr.bf16.mxu0 0
    %565 = vmatpush2.bf16.msra.mxu0 0
    %566 = vmatprep.subr.bf16.mxu0 0
    %567 = vmatpush2.bf16.msra.mxu0 0
    %568 = vmatprep.subr.bf16.mxu0 0
    %569 = vmatpush2.bf16.msra.mxu0 0
    %570 = vmatprep.subr.bf16.mxu0 0
    %571 = vmatpush2.bf16.msra.mxu0 0
    %572 = vmatprep.subr.bf16.mxu0 0
    %573 = vmatpush2.bf16.msra.mxu0 0
    %574 = vmatprep.subr.bf16.mxu0 0
    %575 = vmatpush2.bf16.msra.mxu0 0
    %576 = vmatprep.subr.bf16.mxu0 0
    %577 = vmatpush2.bf16.msra.mxu0 0
    %578 = vmatprep.mubr.bf16.mxu0 0
    %579 = vmatmul.mubr.bf16.gmra.mxu0 %v544
    %v580 = vpop.f32.mrf.mxu0
    %v581 = vadd.f32 %v530, %v580
    %v582 = vpop.f32.mrf.mxu0
    %v583 = vpop.f32.mrf.mxu0
    %v584 = vadd.f32 %v530, %v583
    %v585 = vpop.f32.mrf.mxu0
    %586 = vdwg.mxu0
    %v587 = vadd.f32 %v134, %v581
    %v588 = vadd.f32 %v139, %v584
    %v589 = vld [vmem:[%s3 + $0x4] sm:$0x1]
    %v590 = vld [vmem:[%s3 + $0x5] sm:$0x1]
    %v591 = vsel %vm154, %v587, 0.0
    %592 = vadd.xlane.f32.xlu0 %v591
    %v593 = vpop.xlane.xlu0 %592
    %v594 = vsel %vm154, %v588, 0.0
    %595 = vadd.xlane.f32.xlu0 %v594
    %v596 = vpop.xlane.xlu0 %595
    %v597 = vmul.f32 %v593, %v161
    %v598 = vmul.f32 %v596, %v161
    %v599 = vsub.f32 %v587, %v597
    %v600 = vsub.f32 %v588, %v598
    %v601 = vmul.f32 %v599, %v599
    %v602 = vmul.f32 %v600, %v600
    %v603 = vsel %vm154, %v601, 0.0
    %604 = vadd.xlane.f32.xlu0 %v603
    %v605 = vpop.xlane.xlu0 %604
    %v606 = vsel %vm154, %v602, 0.0
    %607 = vadd.xlane.f32.xlu0 %v606
    %v608 = vpop.xlane.xlu0 %607
    %v609 = vmul.f32 %v605, %v161
    %v610 = vmul.f32 %v608, %v161
    %v611 = vadd.f32 %v609, 1e-05
    %v612 = vadd.f32 %v610, 1e-05
    %v613 = vrsqrt.pop %v611
    %v614 = vrsqrt.pop %v612
    %v615 = vmul.f32 %v599, %v613
    %v616 = vmul.f32 %v600, %v614
    %v617 = vlaneseq
    %v618 = vshrl.u32 %v617, 7
    %v619 = vsub.s32 0, %v618
    %v620 = vrot.slane %v589, %v619
    %v621 = vmul.f32 %v615, %v620
    %v622 = vmul.f32 %v616, %v620
    %v623 = vlaneseq
    %v624 = vshrl.u32 %v623, 7
    %v625 = vsub.s32 0, %v624
    %v626 = vrot.slane %v590, %v625
    %v627 = vadd.f32 %v621, %v626
    %v628 = vadd.f32 %v622, %v626
    %v629 = vpack.c.bf16 %v628, %v627
    %v630 = vld [vmem:[#allocation2 + $0x8] sm:$0xf]
    %v631 = vld [vmem:[#allocation2 + $0x14] sm:$0xf]
    %v632 = vld [vmem:[#allocation2 + $0x20] sm:$0xf]
    %v633 = vld [vmem:[#allocation2 + $0x2c] sm:$0xf]
    %v634 = vld [vmem:[%s3 + $0x6] sm:$0x1]
    %v635 = vlaneseq
    %v636 = vshrl.u32 %v635, 7
    %v637 = vsub.s32 0, %v636
    %v638 = vrot.slane %v634, %v637
    %v643 = vunpack.c.l.b16 %v630
    %v644 = vunpack.c.l.b16 %v631
    %v645 = vunpack.c.l.b16 %v632
    %v646 = vunpack.c.l.b16 %v633
    %v647 = vpack.c.b16 %v644, %v643
    %v648 = vpack.c.b16 %v646, %v645
    %v652 = vsel %vm154, %v629, 0
    %654 = vmatprep.subr.bf16.mxu0 0
    %655 = vmatpush1.bf16.msra.mxu0 0
    %656 = vmatprep.subr.bf16.mxu0 0
    %657 = vmatpush1.bf16.msra.mxu0 0
    %658 = vmatprep.subr.bf16.mxu0 0
    %659 = vmatpush1.bf16.msra.mxu0 0
    %660 = vmatprep.subr.bf16.mxu0 0
    %661 = vmatpush1.bf16.msra.mxu0 0
    %662 = vmatprep.subr.bf16.mxu0 0
    %663 = vmatpush1.bf16.msra.mxu0 0
    %664 = vmatprep.subr.bf16.mxu0 0
    %665 = vmatpush1.bf16.msra.mxu0 0
    %666 = vmatprep.subr.bf16.mxu0 0
    %667 = vmatpush1.bf16.msra.mxu0 %v648
    %668 = vmatprep.subr.bf16.mxu0 0
    %669 = vmatpush1.bf16.msra.mxu0 %v647
    %670 = vmatprep.subr.bf16.mxu0 0
    %671 = vmatpush2.bf16.msra.mxu0 0
    %672 = vmatprep.subr.bf16.mxu0 0
    %673 = vmatpush2.bf16.msra.mxu0 0
    %674 = vmatprep.subr.bf16.mxu0 0
    %675 = vmatpush2.bf16.msra.mxu0 0
    %676 = vmatprep.subr.bf16.mxu0 0
    %677 = vmatpush2.bf16.msra.mxu0 0
    %678 = vmatprep.subr.bf16.mxu0 0
    %679 = vmatpush2.bf16.msra.mxu0 0
    %680 = vmatprep.subr.bf16.mxu0 0
    %681 = vmatpush2.bf16.msra.mxu0 0
    %682 = vmatprep.subr.bf16.mxu0 0
    %683 = vmatpush2.bf16.msra.mxu0 0
    %684 = vmatprep.subr.bf16.mxu0 0
    %685 = vmatpush2.bf16.msra.mxu0 0
    %686 = vmatprep.mubr.bf16.mxu0 0
    %687 = vmatmul.mubr.bf16.gmra.mxu0 %v652
    %v688 = vpop.f32.mrf.mxu0
    %v689 = vadd.f32 %v638, %v688
    %v690 = vpop.f32.mrf.mxu0
    %v691 = vpop.f32.mrf.mxu0
    %v692 = vadd.f32 %v638, %v691
    %v693 = vpop.f32.mrf.mxu0
    %694 = vdwg.mxu0
    %v695 = vmul.f32 %v689, %v689
    %v696 = vmul.f32 %v692, %v692
    %v697 = vmul.f32 %v689, %v695
    %v698 = vmul.f32 %v692, %v696
    %v699 = vmul.f32 %v697, 0.044715
    %v700 = vmul.f32 %v698, 0.044715
    %v701 = vadd.f32 %v689, %v699
    %v702 = vadd.f32 %v692, %v700
    %v703 = vmul.f32 %v701, 0.7978846
    %v704 = vmul.f32 %v702, 0.7978846
    %v705 = vtanh.pop %v703
    %v706 = vtanh.pop %v704
    %v707 = vadd.f32 %v705, 1.0
    %v708 = vadd.f32 %v706, 1.0
    %v709 = vmul.f32 %v707, 0.5
    %v710 = vmul.f32 %v708, 0.5
    %v711 = vmul.f32 %v689, %v709
    %v712 = vmul.f32 %v692, %v710
    %v713 = vpack.c.bf16 %v712, %v711
    %v714 = vld [vmem:[#allocation2 + $0x60] sm:$0xf]
    %v715 = vld [vmem:[#allocation2 + $0x6c] sm:$0xf]
    %v716 = vld [vmem:[#allocation2 + $0x78] sm:$0xf]
    %v717 = vld [vmem:[#allocation2 + $0x84] sm:$0xf]
    %v718 = vld [vmem:[#allocation2 + $0x90] sm:$0xf]
    %v719 = vld [vmem:[#allocation2 + $0x9c] sm:$0xf]
    %v720 = vld [vmem:[#allocation2 + $0xa8] sm:$0xf]
    %v721 = vld [vmem:[#allocation2 + $0xb4] sm:$0xf]
    %v722 = vld [vmem:[%s3 + $0x7] sm:$0x1]
    %v723 = vlaneseq
    %v724 = vshrl.u32 %v723, 7
    %v725 = vsub.s32 0, %v724
    %v726 = vrot.slane %v722, %v725
    %v735 = vunpack.c.l.b16 %v714
    %v736 = vunpack.c.l.b16 %v715
    %v737 = vunpack.c.l.b16 %v716
    %v738 = vunpack.c.l.b16 %v717
    %v739 = vunpack.c.l.b16 %v718
    %v740 = vunpack.c.l.b16 %v719
    %v741 = vunpack.c.l.b16 %v720
    %v742 = vunpack.c.l.b16 %v721
    %v743 = vpack.c.b16 %v736, %v735
    %v744 = vpack.c.b16 %v738, %v737
    %v745 = vpack.c.b16 %v740, %v739
    %v746 = vpack.c.b16 %v742, %v741
    %vm751 = vcmask 523264
    %v753 = vsel %vm751, %v713, 0
    %755 = vmatprep.subr.bf16.mxu0 0
    %756 = vmatpush1.bf16.msra.mxu0 0
    %757 = vmatprep.subr.bf16.mxu0 0
    %758 = vmatpush1.bf16.msra.mxu0 0
    %759 = vmatprep.subr.bf16.mxu0 0
    %760 = vmatpush1.bf16.msra.mxu0 0
    %761 = vmatprep.subr.bf16.mxu0 0
    %762 = vmatpush1.bf16.msra.mxu0 0
    %763 = vmatprep.subr.bf16.mxu0 0
    %764 = vmatpush1.bf16.msra.mxu0 %v746
    %765 = vmatprep.subr.bf16.mxu0 0
    %766 = vmatpush1.bf16.msra.mxu0 %v745
    %767 = vmatprep.subr.bf16.mxu0 0
    %768 = vmatpush1.bf16.msra.mxu0 %v744
    %769 = vmatprep.subr.bf16.mxu0 0
    %770 = vmatpush1.bf16.msra.mxu0 %v743
    %771 = vmatprep.subr.bf16.mxu0 0
    %772 = vmatpush2.bf16.msra.mxu0 0
    %773 = vmatprep.subr.bf16.mxu0 0
    %774 = vmatpush2.bf16.msra.mxu0 0
    %775 = vmatprep.subr.bf16.mxu0 0
    %776 = vmatpush2.bf16.msra.mxu0 0
    %777 = vmatprep.subr.bf16.mxu0 0
    %778 = vmatpush2.bf16.msra.mxu0 0
    %779 = vmatprep.subr.bf16.mxu0 0
    %780 = vmatpush2.bf16.msra.mxu0 0
    %781 = vmatprep.subr.bf16.mxu0 0
    %782 = vmatpush2.bf16.msra.mxu0 0
    %783 = vmatprep.subr.bf16.mxu0 0
    %784 = vmatpush2.bf16.msra.mxu0 0
    %785 = vmatprep.subr.bf16.mxu0 0
    %786 = vmatpush2.bf16.msra.mxu0 0
    %787 = vmatprep.mubr.bf16.mxu0 0
    %788 = vmatmul.mubr.bf16.gmra.mxu0 %v753
    %v789 = vpop.f32.mrf.mxu0
    %v790 = vadd.f32 %v726, %v789
    %v791 = vpop.f32.mrf.mxu0
    %v792 = vpop.f32.mrf.mxu0
    %v793 = vadd.f32 %v726, %v792
    %v794 = vpop.f32.mrf.mxu0
    %795 = vdwg.mxu0
    %v796 = vadd.f32 %v587, %v790
    %v797 = vadd.f32 %v588, %v793
    %v798 = vld [vmem:[%s3 + $0x8] sm:$0x1]
    %v799 = vld [vmem:[%s3 + $0x9] sm:$0x1]
    %v800 = vsel %vm154, %v796, 0.0
    %801 = vadd.xlane.f32.xlu0 %v800
    %v802 = vpop.xlane.xlu0 %801
    %v803 = vsel %vm154, %v797, 0.0
    %804 = vadd.xlane.f32.xlu0 %v803
    %v805 = vpop.xlane.xlu0 %804
    %v806 = vmul.f32 %v802, %v161
    %v807 = vmul.f32 %v805, %v161
    %v808 = vsub.f32 %v796, %v806
    %v809 = vsub.f32 %v797, %v807
    %v810 = vmul.f32 %v808, %v808
    %v811 = vmul.f32 %v809, %v809
    %v812 = vsel %vm154, %v810, 0.0
    %813 = vadd.xlane.f32.xlu0 %v812
    %v814 = vpop.xlane.xlu0 %813
    %v815 = vsel %vm154, %v811, 0.0
    %816 = vadd.xlane.f32.xlu0 %v815
    %v817 = vpop.xlane.xlu0 %816
    %v818 = vmul.f32 %v814, %v161
    %v819 = vmul.f32 %v817, %v161
    %v820 = vadd.f32 %v818, 1e-05
    %v821 = vadd.f32 %v819, 1e-05
    %v822 = vrsqrt.pop %v820
    %v823 = vrsqrt.pop %v821
    %v824 = vmul.f32 %v808, %v822
    %v825 = vmul.f32 %v809, %v823
    %v826 = vlaneseq
    %v827 = vshrl.u32 %v826, 7
    %v828 = vsub.s32 0, %v827
    %v829 = vrot.slane %v798, %v828
    %v830 = vmul.f32 %v824, %v829
    %v831 = vmul.f32 %v825, %v829
    %v832 = vlaneseq
    %v833 = vshrl.u32 %v832, 7
    %v834 = vsub.s32 0, %v833
    %v835 = vrot.slane %v799, %v834
    %v836 = vadd.f32 %v830, %v835
    %v837 = vadd.f32 %v831, %v835
    %v838 = vpack.c.bf16 %v837, %v836
    %v839 = vld [vmem:[#allocation2 + $0x30] sm:$0xf]
    %v840 = vld [vmem:[#allocation2 + $0x3c] sm:$0xf]
    %v841 = vld [vmem:[#allocation2 + $0x48] sm:$0xf]
    %v842 = vld [vmem:[#allocation2 + $0x54] sm:$0xf]
    %v843 = vld [vmem:[%s3 + $0xa] sm:$0x1]
    %v844 = vlaneseq
    %v845 = vshrl.u32 %v844, 7
    %v846 = vsub.s32 0, %v845
    %v847 = vrot.slane %v843, %v846
    %v852 = vunpack.c.l.b16 %v839
    %v853 = vunpack.c.l.b16 %v840
    %v854 = vunpack.c.l.b16 %v841
    %v855 = vunpack.c.l.b16 %v842
    %v856 = vpack.c.b16 %v853, %v852
    %v857 = vpack.c.b16 %v855, %v854
    %v861 = vsel %vm154, %v838, 0
    %863 = vmatprep.subr.bf16.mxu0 0
    %864 = vmatpush1.bf16.msra.mxu0 0
    %865 = vmatprep.subr.bf16.mxu0 0
    %866 = vmatpush1.bf16.msra.mxu0 0
    %867 = vmatprep.subr.bf16.mxu0 0
    %868 = vmatpush1.bf16.msra.mxu0 0
    %869 = vmatprep.subr.bf16.mxu0 0
    %870 = vmatpush1.bf16.msra.mxu0 0
    %871 = vmatprep.subr.bf16.mxu0 0
    %872 = vmatpush1.bf16.msra.mxu0 0
    %873 = vmatprep.subr.bf16.mxu0 0
    %874 = vmatpush1.bf16.msra.mxu0 0
    %875 = vmatprep.subr.bf16.mxu0 0
    %876 = vmatpush1.bf16.msra.mxu0 %v857
    %877 = vmatprep.subr.bf16.mxu0 0
    %878 = vmatpush1.bf16.msra.mxu0 %v856
    %879 = vmatprep.subr.bf16.mxu0 0
    %880 = vmatpush2.bf16.msra.mxu0 0
    %881 = vmatprep.subr.bf16.mxu0 0
    %882 = vmatpush2.bf16.msra.mxu0 0
    %883 = vmatprep.subr.bf16.mxu0 0
    %884 = vmatpush2.bf16.msra.mxu0 0
    %885 = vmatprep.subr.bf16.mxu0 0
    %886 = vmatpush2.bf16.msra.mxu0 0
    %887 = vmatprep.subr.bf16.mxu0 0
    %888 = vmatpush2.bf16.msra.mxu0 0
    %889 = vmatprep.subr.bf16.mxu0 0
    %890 = vmatpush2.bf16.msra.mxu0 0
    %891 = vmatprep.subr.bf16.mxu0 0
    %892 = vmatpush2.bf16.msra.mxu0 0
    %893 = vmatprep.subr.bf16.mxu0 0
    %894 = vmatpush2.bf16.msra.mxu0 0
    %895 = vmatprep.mubr.bf16.mxu0 0
    %896 = vmatmul.mubr.bf16.gmra.mxu0 %v861
    %v897 = vpop.f32.mrf.mxu0
    %v898 = vadd.f32 %v847, %v897
    %v899 = vpop.f32.mrf.mxu0
    %v900 = vpop.f32.mrf.mxu0
    %v901 = vadd.f32 %v847, %v900
    %v902 = vpop.f32.mrf.mxu0
    %903 = vdwg.mxu0
    %v904 = vpack.c.bf16 %v901, %v898
    %906 = vrot.lane.b32.xlu0 %v904, 96
    %v907 = vpop.permute.xlu0 %906
    %v909 = vsel %vm264, %v904, 0
    %v912 = vsel %vm264, %v907, 0
    %914 = vmatprep.subr.bf16.mxu0 0
    %915 = vmatpush1.bf16.xpose.msra.mxu0 0
    %916 = vmatprep.subr.bf16.mxu0 0
    %917 = vmatpush1.bf16.xpose.msra.mxu0 0
    %918 = vmatprep.subr.bf16.mxu0 0
    %919 = vmatpush1.bf16.xpose.msra.mxu0 0
    %920 = vmatprep.subr.bf16.mxu0 0
    %921 = vmatpush1.bf16.xpose.msra.mxu0 0
    %922 = vmatprep.subr.bf16.mxu0 0
    %923 = vmatpush1.bf16.xpose.msra.mxu0 0
    %924 = vmatprep.subr.bf16.mxu0 0
    %925 = vmatpush1.bf16.xpose.msra.mxu0 0
    %926 = vmatprep.subr.bf16.mxu0 0
    %927 = vmatpush1.bf16.xpose.msra.mxu0 0
    %928 = vmatprep.subr.bf16.mxu0 0
    %929 = vmatpush1.bf16.xpose.msra.mxu0 %v912
    %930 = vmatprep.subr.bf16.mxu0 0
    %931 = vmatpush2.bf16.xpose.msra.mxu0 0
    %932 = vmatprep.subr.bf16.mxu0 0
    %933 = vmatpush2.bf16.xpose.msra.mxu0 0
    %934 = vmatprep.subr.bf16.mxu0 0
    %935 = vmatpush2.bf16.xpose.msra.mxu0 0
    %936 = vmatprep.subr.bf16.mxu0 0
    %937 = vmatpush2.bf16.xpose.msra.mxu0 0
    %938 = vmatprep.subr.bf16.mxu0 0
    %939 = vmatpush2.bf16.xpose.msra.mxu0 0
    %940 = vmatprep.subr.bf16.mxu0 0
    %941 = vmatpush2.bf16.xpose.msra.mxu0 0
    %942 = vmatprep.subr.bf16.mxu0 0
    %943 = vmatpush2.bf16.xpose.msra.mxu0 0
    %944 = vmatprep.subr.bf16.mxu0 0
    %945 = vmatpush2.bf16.xpose.msra.mxu0 0
    %946 = vmatprep.mubr.bf16.mxu0 0
    %947 = vmatmul.mubr.bf16.gmra.mxu0 %v909
    %v948 = vpop.f32.mrf.mxu0
    %v949 = vadd.f32 0.0, %v948
    %v950 = vpop.f32.mrf.mxu0
    %v951 = vpop.f32.mrf.mxu0
    %v952 = vadd.f32 0.0, %v951
    %v953 = vpop.f32.mrf.mxu0
    %954 = vdwg.mxu0
    %v955 = vmul.f32 %v949, 0.25
    %v956 = vmul.f32 %v952, 0.25
    %v957 = vadd.f32 %v955, %v150
    %v958 = vadd.f32 %v956, %v151
    %v959 = vsel %vm264, %v957, -inf
    %960 = vmax.xlane.f32.xlu0 %v959
    %v961 = vpop.xlane.xlu0 %960
    %v962 = vsel %vm264, %v958, -inf
    %963 = vmax.xlane.f32.xlu0 %v962
    %v964 = vpop.xlane.xlu0 %963
    %v965 = vsub.f32 %v957, %v961
    %v966 = vsub.f32 %v958, %v964
    %v967 = vmul.f32 %v965, 1.442695
    %v968 = vpow.pop %v967
    %v969 = vmul.f32 %v966, 1.442695
    %v970 = vpow.pop %v969
    %v971 = vsel %vm264, %v968, 0.0
    %972 = vadd.xlane.f32.xlu0 %v971
    %v973 = vpop.xlane.xlu0 %972
    %v974 = vsel %vm264, %v970, 0.0
    %975 = vadd.xlane.f32.xlu0 %v974
    %v976 = vpop.xlane.xlu0 %975
    %v977 = vrcp.pop %v973
    %v978 = vrcp.pop %v976
    %v979 = vmul.f32 %v968, %v977
    %v980 = vmul.f32 %v970, %v978
    %v981 = vpack.c.bf16 %v980, %v979
    %982 = vrot.lane.b32.xlu0 %v904, 64
    %v983 = vpop.permute.xlu0 %982
    %v986 = vsel %vm264, %v981, 0
    %988 = vmatprep.subr.bf16.mxu0 0
    %989 = vmatpush1.bf16.msra.mxu0 0
    %990 = vmatprep.subr.bf16.mxu0 0
    %991 = vmatpush1.bf16.msra.mxu0 0
    %992 = vmatprep.subr.bf16.mxu0 0
    %993 = vmatpush1.bf16.msra.mxu0 0
    %994 = vmatprep.subr.bf16.mxu0 0
    %995 = vmatpush1.bf16.msra.mxu0 0
    %996 = vmatprep.subr.bf16.mxu0 0
    %997 = vmatpush1.bf16.msra.mxu0 0
    %998 = vmatprep.subr.bf16.mxu0 0
    %999 = vmatpush1.bf16.msra.mxu0 0
    %1000 = vmatprep.subr.bf16.mxu0 0
    %1001 = vmatpush1.bf16.msra.mxu0 0
    %1002 = vmatprep.subr.bf16.mxu0 0
    %1003 = vmatpush1.bf16.msra.mxu0 %v983
    %1004 = vmatprep.subr.bf16.mxu0 0
    %1005 = vmatpush2.bf16.msra.mxu0 0
    %1006 = vmatprep.subr.bf16.mxu0 0
    %1007 = vmatpush2.bf16.msra.mxu0 0
    %1008 = vmatprep.subr.bf16.mxu0 0
    %1009 = vmatpush2.bf16.msra.mxu0 0
    %1010 = vmatprep.subr.bf16.mxu0 0
    %1011 = vmatpush2.bf16.msra.mxu0 0
    %1012 = vmatprep.subr.bf16.mxu0 0
    %1013 = vmatpush2.bf16.msra.mxu0 0
    %1014 = vmatprep.subr.bf16.mxu0 0
    %1015 = vmatpush2.bf16.msra.mxu0 0
    %1016 = vmatprep.subr.bf16.mxu0 0
    %1017 = vmatpush2.bf16.msra.mxu0 0
    %1018 = vmatprep.subr.bf16.mxu0 0
    %1019 = vmatpush2.bf16.msra.mxu0 0
    %1020 = vmatprep.mubr.bf16.mxu0 0
    %1021 = vmatmul.mubr.bf16.gmra.mxu0 %v986
    %v1022 = vpop.f32.mrf.mxu0
    %v1023 = vadd.f32 0.0, %v1022
    %v1024 = vpop.f32.mrf.mxu0
    %v1025 = vpop.f32.mrf.mxu0
    %v1026 = vadd.f32 0.0, %v1025
    %v1027 = vpop.f32.mrf.mxu0
    %1028 = vdwg.mxu0
    %1029 = vrot.lane.b32.xlu0 %v904, 112
    %v1030 = vpop.permute.xlu0 %1029
    %1031 = vrot.lane.b32.xlu0 %v904, 80
    %v1032 = vpop.permute.xlu0 %1031
    %v1034 = vsel %vm264, %v1030, 0
    %v1037 = vsel %vm264, %v1032, 0
    %1039 = vmatprep.subr.bf16.mxu0 0
    %1040 = vmatpush1.bf16.xpose.msra.mxu0 0
    %1041 = vmatprep.subr.bf16.mxu0 0
    %1042 = vmatpush1.bf16.xpose.msra.mxu0 0
    %1043 = vmatprep.subr.bf16.mxu0 0
    %1044 = vmatpush1.bf16.xpose.msra.mxu0 0
    %1045 = vmatprep.subr.bf16.mxu0 0
    %1046 = vmatpush1.bf16.xpose.msra.mxu0 0
    %1047 = vmatprep.subr.bf16.mxu0 0
    %1048 = vmatpush1.bf16.xpose.msra.mxu0 0
    %1049 = vmatprep.subr.bf16.mxu0 0
    %1050 = vmatpush1.bf16.xpose.msra.mxu0 0
    %1051 = vmatprep.subr.bf16.mxu0 0
    %1052 = vmatpush1.bf16.xpose.msra.mxu0 0
    %1053 = vmatprep.subr.bf16.mxu0 0
    %1054 = vmatpush1.bf16.xpose.msra.mxu0 %v1037
    %1055 = vmatprep.subr.bf16.mxu0 0
    %1056 = vmatpush2.bf16.xpose.msra.mxu0 0
    %1057 = vmatprep.subr.bf16.mxu0 0
    %1058 = vmatpush2.bf16.xpose.msra.mxu0 0
    %1059 = vmatprep.subr.bf16.mxu0 0
    %1060 = vmatpush2.bf16.xpose.msra.mxu0 0
    %1061 = vmatprep.subr.bf16.mxu0 0
    %1062 = vmatpush2.bf16.xpose.msra.mxu0 0
    %1063 = vmatprep.subr.bf16.mxu0 0
    %1064 = vmatpush2.bf16.xpose.msra.mxu0 0
    %1065 = vmatprep.subr.bf16.mxu0 0
    %1066 = vmatpush2.bf16.xpose.msra.mxu0 0
    %1067 = vmatprep.subr.bf16.mxu0 0
    %1068 = vmatpush2.bf16.xpose.msra.mxu0 0
    %1069 = vmatprep.subr.bf16.mxu0 0
    %1070 = vmatpush2.bf16.xpose.msra.mxu0 0
    %1071 = vmatprep.mubr.bf16.mxu0 0
    %1072 = vmatmul.mubr.bf16.gmra.mxu0 %v1034
    %v1073 = vpop.f32.mrf.mxu0
    %v1074 = vadd.f32 0.0, %v1073
    %v1075 = vpop.f32.mrf.mxu0
    %v1076 = vpop.f32.mrf.mxu0
    %v1077 = vadd.f32 0.0, %v1076
    %v1078 = vpop.f32.mrf.mxu0
    %1079 = vdwg.mxu0
    %v1080 = vmul.f32 %v1074, 0.25
    %v1081 = vmul.f32 %v1077, 0.25
    %v1082 = vadd.f32 %v1080, %v150
    %v1083 = vadd.f32 %v1081, %v151
    %v1084 = vsel %vm264, %v1082, -inf
    %1085 = vmax.xlane.f32.xlu0 %v1084
    %v1086 = vpop.xlane.xlu0 %1085
    %v1087 = vsel %vm264, %v1083, -inf
    %1088 = vmax.xlane.f32.xlu0 %v1087
    %v1089 = vpop.xlane.xlu0 %1088
    %v1090 = vsub.f32 %v1082, %v1086
    %v1091 = vsub.f32 %v1083, %v1089
    %v1092 = vmul.f32 %v1090, 1.442695
    %v1093 = vpow.pop %v1092
    %v1094 = vmul.f32 %v1091, 1.442695
    %v1095 = vpow.pop %v1094
    %v1096 = vsel %vm264, %v1093, 0.0
    %1097 = vadd.xlane.f32.xlu0 %v1096
    %v1098 = vpop.xlane.xlu0 %1097
    %v1099 = vsel %vm264, %v1095, 0.0
    %1100 = vadd.xlane.f32.xlu0 %v1099
    %v1101 = vpop.xlane.xlu0 %1100
    %v1102 = vrcp.pop %v1098
    %v1103 = vrcp.pop %v1101
    %v1104 = vmul.f32 %v1093, %v1102
    %v1105 = vmul.f32 %v1095, %v1103
    %v1106 = vpack.c.bf16 %v1105, %v1104
    %1107 = vrot.lane.b32.xlu0 %v904, 48
    %v1108 = vpop.permute.xlu0 %1107
    %v1111 = vsel %vm264, %v1106, 0
    %1113 = vmatprep.subr.bf16.mxu0 0
    %1114 = vmatpush1.bf16.msra.mxu0 0
    %1115 = vmatprep.subr.bf16.mxu0 0
    %1116 = vmatpush1.bf16.msra.mxu0 0
    %1117 = vmatprep.subr.bf16.mxu0 0
    %1118 = vmatpush1.bf16.msra.mxu0 0
    %1119 = vmatprep.subr.bf16.mxu0 0
    %1120 = vmatpush1.bf16.msra.mxu0 0
    %1121 = vmatprep.subr.bf16.mxu0 0
    %1122 = vmatpush1.bf16.msra.mxu0 0
    %1123 = vmatprep.subr.bf16.mxu0 0
    %1124 = vmatpush1.bf16.msra.mxu0 0
    %1125 = vmatprep.subr.bf16.mxu0 0
    %1126 = vmatpush1.bf16.msra.mxu0 0
    %1127 = vmatprep.subr.bf16.mxu0 0
    %1128 = vmatpush1.bf16.msra.mxu0 %v1108
    %1129 = vmatprep.subr.bf16.mxu0 0
    %1130 = vmatpush2.bf16.msra.mxu0 0
    %1131 = vmatprep.subr.bf16.mxu0 0
    %1132 = vmatpush2.bf16.msra.mxu0 0
    %1133 = vmatprep.subr.bf16.mxu0 0
    %1134 = vmatpush2.bf16.msra.mxu0 0
    %1135 = vmatprep.subr.bf16.mxu0 0
    %1136 = vmatpush2.bf16.msra.mxu0 0
    %1137 = vmatprep.subr.bf16.mxu0 0
    %1138 = vmatpush2.bf16.msra.mxu0 0
    %1139 = vmatprep.subr.bf16.mxu0 0
    %1140 = vmatpush2.bf16.msra.mxu0 0
    %1141 = vmatprep.subr.bf16.mxu0 0
    %1142 = vmatpush2.bf16.msra.mxu0 0
    %1143 = vmatprep.subr.bf16.mxu0 0
    %1144 = vmatpush2.bf16.msra.mxu0 0
    %1145 = vmatprep.mubr.bf16.mxu0 0
    %1146 = vmatmul.mubr.bf16.gmra.mxu0 %v1111
    %v1147 = vpop.f32.mrf.mxu0
    %v1148 = vadd.f32 0.0, %v1147
    %v1149 = vpop.f32.mrf.mxu0
    %v1150 = vpop.f32.mrf.mxu0
    %v1151 = vadd.f32 0.0, %v1150
    %v1152 = vpop.f32.mrf.mxu0
    %1153 = vdwg.mxu0
    %1156 = vrot.lane.b32.xlu0 %v1148, 16
    %v1157 = vpop.permute.xlu0 %1156
    %1158 = vrot.lane.b32.xlu0 %v1151, 16
    %v1159 = vpop.permute.xlu0 %1158
    %v1162 = vsel %vm264, %v1023, %v1157
    %v1163 = vsel %vm264, %v1026, %v1159
    %v1164 = vpack.c.bf16 %v1163, %v1162
    %v1165 = vld [vmem:[#allocation2 + $0x34] sm:$0xf]
    %v1166 = vld [vmem:[#allocation2 + $0x40] sm:$0xf]
    %v1167 = vld [vmem:[#allocation2 + $0x4c] sm:$0xf]
    %v1168 = vld [vmem:[#allocation2 + $0x58] sm:$0xf]
    %v1169 = vld [vmem:[%s3 + $0xb] sm:$0x1]
    %v1170 = vlaneseq
    %v1171 = vshrl.u32 %v1170, 7
    %v1172 = vsub.s32 0, %v1171
    %v1173 = vrot.slane %v1169, %v1172
    %v1178 = vunpack.c.l.b16 %v1165
    %v1179 = vunpack.c.l.b16 %v1166
    %v1180 = vunpack.c.l.b16 %v1167
    %v1181 = vunpack.c.l.b16 %v1168
    %v1182 = vpack.c.b16 %v1179, %v1178
    %v1183 = vpack.c.b16 %v1181, %v1180
    %v1187 = vsel %vm154, %v1164, 0
    %1189 = vmatprep.subr.bf16.mxu0 0
    %1190 = vmatpush1.bf16.msra.mxu0 0
    %1191 = vmatprep.subr.bf16.mxu0 0
    %1192 = vmatpush1.bf16.msra.mxu0 0
    %1193 = vmatprep.subr.bf16.mxu0 0
    %1194 = vmatpush1.bf16.msra.mxu0 0
    %1195 = vmatprep.subr.bf16.mxu0 0
    %1196 = vmatpush1.bf16.msra.mxu0 0
    %1197 = vmatprep.subr.bf16.mxu0 0
    %1198 = vmatpush1.bf16.msra.mxu0 0
    %1199 = vmatprep.subr.bf16.mxu0 0
    %1200 = vmatpush1.bf16.msra.mxu0 0
    %1201 = vmatprep.subr.bf16.mxu0 0
    %1202 = vmatpush1.bf16.msra.mxu0 %v1183
    %1203 = vmatprep.subr.bf16.mxu0 0
    %1204 = vmatpush1.bf16.msra.mxu0 %v1182
    %1205 = vmatprep.subr.bf16.mxu0 0
    %1206 = vmatpush2.bf16.msra.mxu0 0
    %1207 = vmatprep.subr.bf16.mxu0 0
    %1208 = vmatpush2.bf16.msra.mxu0 0
    %1209 = vmatprep.subr.bf16.mxu0 0
    %1210 = vmatpush2.bf16.msra.mxu0 0
    %1211 = vmatprep.subr.bf16.mxu0 0
    %1212 = vmatpush2.bf16.msra.mxu0 0
    %1213 = vmatprep.subr.bf16.mxu0 0
    %1214 = vmatpush2.bf16.msra.mxu0 0
    %1215 = vmatprep.subr.bf16.mxu0 0
    %1216 = vmatpush2.bf16.msra.mxu0 0
    %1217 = vmatprep.subr.bf16.mxu0 0
    %1218 = vmatpush2.bf16.msra.mxu0 0
    %1219 = vmatprep.subr.bf16.mxu0 0
    %1220 = vmatpush2.bf16.msra.mxu0 0
    %1221 = vmatprep.mubr.bf16.mxu0 0
    %1222 = vmatmul.mubr.bf16.gmra.mxu0 %v1187
    %v1223 = vpop.f32.mrf.mxu0
    %v1224 = vadd.f32 %v1173, %v1223
    %v1225 = vpop.f32.mrf.mxu0
    %v1226 = vpop.f32.mrf.mxu0
    %v1227 = vadd.f32 %v1173, %v1226
    %v1228 = vpop.f32.mrf.mxu0
    %1229 = vdwg.mxu0
    %v1230 = vadd.f32 %v796, %v1224
    %v1231 = vadd.f32 %v797, %v1227
    %v1232 = vld [vmem:[%s3 + $0xc] sm:$0x1]
    %v1233 = vld [vmem:[%s3 + $0xd] sm:$0x1]
    %v1234 = vsel %vm154, %v1230, 0.0
    %1235 = vadd.xlane.f32.xlu0 %v1234
    %v1236 = vpop.xlane.xlu0 %1235
    %v1237 = vsel %vm154, %v1231, 0.0
    %1238 = vadd.xlane.f32.xlu0 %v1237
    %v1239 = vpop.xlane.xlu0 %1238
    %v1240 = vmul.f32 %v1236, %v161
    %v1241 = vmul.f32 %v1239, %v161
    %v1242 = vsub.f32 %v1230, %v1240
    %v1243 = vsub.f32 %v1231, %v1241
    %v1244 = vmul.f32 %v1242, %v1242
    %v1245 = vmul.f32 %v1243, %v1243
    %v1246 = vsel %vm154, %v1244, 0.0
    %1247 = vadd.xlane.f32.xlu0 %v1246
    %v1248 = vpop.xlane.xlu0 %1247
    %v1249 = vsel %vm154, %v1245, 0.0
    %1250 = vadd.xlane.f32.xlu0 %v1249
    %v1251 = vpop.xlane.xlu0 %1250
    %v1252 = vmul.f32 %v1248, %v161
    %v1253 = vmul.f32 %v1251, %v161
    %v1254 = vadd.f32 %v1252, 1e-05
    %v1255 = vadd.f32 %v1253, 1e-05
    %v1256 = vrsqrt.pop %v1254
    %v1257 = vrsqrt.pop %v1255
    %v1258 = vmul.f32 %v1242, %v1256
    %v1259 = vmul.f32 %v1243, %v1257
    %v1260 = vlaneseq
    %v1261 = vshrl.u32 %v1260, 7
    %v1262 = vsub.s32 0, %v1261
    %v1263 = vrot.slane %v1232, %v1262
    %v1264 = vmul.f32 %v1258, %v1263
    %v1265 = vmul.f32 %v1259, %v1263
    %v1266 = vlaneseq
    %v1267 = vshrl.u32 %v1266, 7
    %v1268 = vsub.s32 0, %v1267
    %v1269 = vrot.slane %v1233, %v1268
    %v1270 = vadd.f32 %v1264, %v1269
    %v1271 = vadd.f32 %v1265, %v1269
    %v1272 = vpack.c.bf16 %v1271, %v1270
    %v1273 = vld [vmem:[#allocation2 + $0x38] sm:$0xf]
    %v1274 = vld [vmem:[#allocation2 + $0x44] sm:$0xf]
    %v1275 = vld [vmem:[#allocation2 + $0x50] sm:$0xf]
    %v1276 = vld [vmem:[#allocation2 + $0x5c] sm:$0xf]
    %v1277 = vld [vmem:[%s3 + $0xe] sm:$0x1]
    %v1278 = vlaneseq
    %v1279 = vshrl.u32 %v1278, 7
    %v1280 = vsub.s32 0, %v1279
    %v1281 = vrot.slane %v1277, %v1280
    %v1286 = vunpack.c.l.b16 %v1273
    %v1287 = vunpack.c.l.b16 %v1274
    %v1288 = vunpack.c.l.b16 %v1275
    %v1289 = vunpack.c.l.b16 %v1276
    %v1290 = vpack.c.b16 %v1287, %v1286
    %v1291 = vpack.c.b16 %v1289, %v1288
    %v1295 = vsel %vm154, %v1272, 0
    %1297 = vmatprep.subr.bf16.mxu0 0
    %1298 = vmatpush1.bf16.msra.mxu0 0
    %1299 = vmatprep.subr.bf16.mxu0 0
    %1300 = vmatpush1.bf16.msra.mxu0 0
    %1301 = vmatprep.subr.bf16.mxu0 0
    %1302 = vmatpush1.bf16.msra.mxu0 0
    %1303 = vmatprep.subr.bf16.mxu0 0
    %1304 = vmatpush1.bf16.msra.mxu0 0
    %1305 = vmatprep.subr.bf16.mxu0 0
    %1306 = vmatpush1.bf16.msra.mxu0 0
    %1307 = vmatprep.subr.bf16.mxu0 0
    %1308 = vmatpush1.bf16.msra.mxu0 0
    %1309 = vmatprep.subr.bf16.mxu0 0
    %1310 = vmatpush1.bf16.msra.mxu0 %v1291
    %1311 = vmatprep.subr.bf16.mxu0 0
    %1312 = vmatpush1.bf16.msra.mxu0 %v1290
    %1313 = vmatprep.subr.bf16.mxu0 0
    %1314 = vmatpush2.bf16.msra.mxu0 0
    %1315 = vmatprep.subr.bf16.mxu0 0
    %1316 = vmatpush2.bf16.msra.mxu0 0
    %1317 = vmatprep.subr.bf16.mxu0 0
    %1318 = vmatpush2.bf16.msra.mxu0 0
    %1319 = vmatprep.subr.bf16.mxu0 0
    %1320 = vmatpush2.bf16.msra.mxu0 0
    %1321 = vmatprep.subr.bf16.mxu0 0
    %1322 = vmatpush2.bf16.msra.mxu0 0
    %1323 = vmatprep.subr.bf16.mxu0 0
    %1324 = vmatpush2.bf16.msra.mxu0 0
    %1325 = vmatprep.subr.bf16.mxu0 0
    %1326 = vmatpush2.bf16.msra.mxu0 0
    %1327 = vmatprep.subr.bf16.mxu0 0
    %1328 = vmatpush2.bf16.msra.mxu0 0
    %1329 = vmatprep.mubr.bf16.mxu0 0
    %1330 = vmatmul.mubr.bf16.gmra.mxu0 %v1295
    %v1331 = vpop.f32.mrf.mxu0
    %v1332 = vadd.f32 %v1281, %v1331
    %v1333 = vpop.f32.mrf.mxu0
    %v1334 = vpop.f32.mrf.mxu0
    %v1335 = vadd.f32 %v1281, %v1334
    %v1336 = vpop.f32.mrf.mxu0
    %1337 = vdwg.mxu0
    %v1338 = vmul.f32 %v1332, %v1332
    %v1339 = vmul.f32 %v1335, %v1335
    %v1340 = vmul.f32 %v1332, %v1338
    %v1341 = vmul.f32 %v1335, %v1339
    %v1342 = vmul.f32 %v1340, 0.044715
    %v1343 = vmul.f32 %v1341, 0.044715
    %v1344 = vadd.f32 %v1332, %v1342
    %v1345 = vadd.f32 %v1335, %v1343
    %v1346 = vmul.f32 %v1344, 0.7978846
    %v1347 = vmul.f32 %v1345, 0.7978846
    %v1348 = vtanh.pop %v1346
    %v1349 = vtanh.pop %v1347
    %v1350 = vadd.f32 %v1348, 1.0
    %v1351 = vadd.f32 %v1349, 1.0
    %v1352 = vmul.f32 %v1350, 0.5
    %v1353 = vmul.f32 %v1351, 0.5
    %v1354 = vmul.f32 %v1332, %v1352
    %v1355 = vmul.f32 %v1335, %v1353
    %v1356 = vpack.c.bf16 %v1355, %v1354
    %v1357 = vld [vmem:[#allocation2 + $0xc0] sm:$0xf]
    %v1358 = vld [vmem:[#allocation2 + $0xcc] sm:$0xf]
    %v1359 = vld [vmem:[#allocation2 + $0xd8] sm:$0xf]
    %v1360 = vld [vmem:[#allocation2 + $0xe4] sm:$0xf]
    %v1361 = vld [vmem:[#allocation2 + $0xf0] sm:$0xf]
    %v1362 = vld [vmem:[#allocation2 + $0xfc] sm:$0xf]
    %v1363 = vld [vmem:[#allocation2 + $0x108] sm:$0xf]
    %v1364 = vld [vmem:[#allocation2 + $0x114] sm:$0xf]
    %v1365 = vld [vmem:[%s3 + $0xf] sm:$0x1]
    %v1366 = vlaneseq
    %v1367 = vshrl.u32 %v1366, 7
    %v1368 = vsub.s32 0, %v1367
    %v1369 = vrot.slane %v1365, %v1368
    %v1378 = vunpack.c.l.b16 %v1357
    %v1379 = vunpack.c.l.b16 %v1358
    %v1380 = vunpack.c.l.b16 %v1359
    %v1381 = vunpack.c.l.b16 %v1360
    %v1382 = vunpack.c.l.b16 %v1361
    %v1383 = vunpack.c.l.b16 %v1362
    %v1384 = vunpack.c.l.b16 %v1363
    %v1385 = vunpack.c.l.b16 %v1364
    %v1386 = vpack.c.b16 %v1379, %v1378
    %v1387 = vpack.c.b16 %v1381, %v1380
    %v1388 = vpack.c.b16 %v1383, %v1382
    %v1389 = vpack.c.b16 %v1385, %v1384
    %v1395 = vsel %vm751, %v1356, 0
    %1397 = vmatprep.subr.bf16.mxu0 0
    %1398 = vmatpush1.bf16.msra.mxu0 0
    %1399 = vmatprep.subr.bf16.mxu0 0
    %1400 = vmatpush1.bf16.msra.mxu0 0
    %1401 = vmatprep.subr.bf16.mxu0 0
    %1402 = vmatpush1.bf16.msra.mxu0 0
    %1403 = vmatprep.subr.bf16.mxu0 0
    %1404 = vmatpush1.bf16.msra.mxu0 0
    %1405 = vmatprep.subr.bf16.mxu0 0
    %1406 = vmatpush1.bf16.msra.mxu0 %v1389
    %1407 = vmatprep.subr.bf16.mxu0 0
    %1408 = vmatpush1.bf16.msra.mxu0 %v1388
    %1409 = vmatprep.subr.bf16.mxu0 0
    %1410 = vmatpush1.bf16.msra.mxu0 %v1387
    %1411 = vmatprep.subr.bf16.mxu0 0
    %1412 = vmatpush1.bf16.msra.mxu0 %v1386
    %1413 = vmatprep.subr.bf16.mxu0 0
    %1414 = vmatpush2.bf16.msra.mxu0 0
    %1415 = vmatprep.subr.bf16.mxu0 0
    %1416 = vmatpush2.bf16.msra.mxu0 0
    %1417 = vmatprep.subr.bf16.mxu0 0
    %1418 = vmatpush2.bf16.msra.mxu0 0
    %1419 = vmatprep.subr.bf16.mxu0 0
    %1420 = vmatpush2.bf16.msra.mxu0 0
    %1421 = vmatprep.subr.bf16.mxu0 0
    %1422 = vmatpush2.bf16.msra.mxu0 0
    %1423 = vmatprep.subr.bf16.mxu0 0
    %1424 = vmatpush2.bf16.msra.mxu0 0
    %1425 = vmatprep.subr.bf16.mxu0 0
    %1426 = vmatpush2.bf16.msra.mxu0 0
    %1427 = vmatprep.subr.bf16.mxu0 0
    %1428 = vmatpush2.bf16.msra.mxu0 0
    %1429 = vmatprep.mubr.bf16.mxu0 0
    %1430 = vmatmul.mubr.bf16.gmra.mxu0 %v1395
    %v1431 = vpop.f32.mrf.mxu0
    %v1432 = vadd.f32 %v1369, %v1431
    %v1433 = vpop.f32.mrf.mxu0
    %v1434 = vpop.f32.mrf.mxu0
    %v1435 = vadd.f32 %v1369, %v1434
    %v1436 = vpop.f32.mrf.mxu0
    %1437 = vdwg.mxu0
    %v1438 = vadd.f32 %v1230, %v1432
    %v1439 = vadd.f32 %v1231, %v1435
    %v1441 = vrot.slane %v1439, 7
    %vm1443 = vcmask 1040384
    %v1444 = vsel %vm1443, %v1438, %v1441
    %v1445 = vpack.c.bf16 %v1444, %v1444
    %v1446 = vld [vmem:[#allocation2 + $0x120] sm:$0xf]
    %v1447 = vld [vmem:[#allocation2 + $0x12c] sm:$0xf]
    %v1448 = vld [vmem:[#allocation2 + $0x138] sm:$0xf]
    %v1449 = vld [vmem:[#allocation2 + $0x144] sm:$0xf]
    %v1450 = vld [vmem:[%s3 + $0x10] sm:$0x1]
    %v1451 = vlaneseq
    %v1452 = vshrl.u32 %v1451, 7
    %v1453 = vsub.s32 0, %v1452
    %v1454 = vrot.slane %v1450, %v1453
    %v1459 = vunpack.c.l.b16 %v1446
    %v1460 = vunpack.c.l.b16 %v1447
    %v1461 = vunpack.c.l.b16 %v1448
    %v1462 = vunpack.c.l.b16 %v1449
    %v1463 = vpack.c.b16 %v1460, %v1459
    %v1464 = vpack.c.b16 %v1462, %v1461
    %v1468 = vsel %vm154, %v1445, 0
    %1470 = vmatprep.subr.bf16.mxu0 0
    %1471 = vmatpush1.bf16.msra.mxu0 0
    %1472 = vmatprep.subr.bf16.mxu0 0
    %1473 = vmatpush1.bf16.msra.mxu0 0
    %1474 = vmatprep.subr.bf16.mxu0 0
    %1475 = vmatpush1.bf16.msra.mxu0 0
    %1476 = vmatprep.subr.bf16.mxu0 0
    %1477 = vmatpush1.bf16.msra.mxu0 0
    %1478 = vmatprep.subr.bf16.mxu0 0
    %1479 = vmatpush1.bf16.msra.mxu0 0
    %1480 = vmatprep.subr.bf16.mxu0 0
    %1481 = vmatpush1.bf16.msra.mxu0 0
    %1482 = vmatprep.subr.bf16.mxu0 0
    %1483 = vmatpush1.bf16.msra.mxu0 %v1464
    %1484 = vmatprep.subr.bf16.mxu0 0
    %1485 = vmatpush1.bf16.msra.mxu0 %v1463
    %1486 = vmatprep.subr.bf16.mxu0 0
    %1487 = vmatpush2.bf16.msra.mxu0 0
    %1488 = vmatprep.subr.bf16.mxu0 0
    %1489 = vmatpush2.bf16.msra.mxu0 0
    %1490 = vmatprep.subr.bf16.mxu0 0
    %1491 = vmatpush2.bf16.msra.mxu0 0
    %1492 = vmatprep.subr.bf16.mxu0 0
    %1493 = vmatpush2.bf16.msra.mxu0 0
    %1494 = vmatprep.subr.bf16.mxu0 0
    %1495 = vmatpush2.bf16.msra.mxu0 0
    %1496 = vmatprep.subr.bf16.mxu0 0
    %1497 = vmatpush2.bf16.msra.mxu0 0
    %1498 = vmatprep.subr.bf16.mxu0 0
    %1499 = vmatpush2.bf16.msra.mxu0 0
    %1500 = vmatprep.subr.bf16.mxu0 0
    %1501 = vmatpush2.bf16.msra.mxu0 0
    %1502 = vmatprep.mubr.bf16.mxu0 0
    %1503 = vmatmul.mubr.bf16.gmra.mxu0 %v1468
    %v1504 = vpop.f32.mrf.mxu0
    %v1505 = vadd.f32 %v1454, %v1504
    %v1506 = vpop.f32.mrf.mxu0
    %v1507 = vpop.f32.mrf.mxu0
    %v1508 = vpop.f32.mrf.mxu0
    %1509 = vdwg.mxu0
    %1510 = vst [vmem:[#allocation5] sm:$0x3] %v1505
    // Predicated region
    $region22: #{tpu_custom_call.1} parent=1 // pred_check
      _
    $region23: #{tpu_custom_call.1} parent=1 // pred_check_branch
      %1512 = sbr.rel (0) target = $region25
    $region24: #{tpu_custom_call.1} parent=1 // pred_region
      %s1514 = ssub.s32 32, 32
      %1515 = vsyncadd [#allocation4], %s1514
      %s1517 = sshll.u32 [#allocation5], 4
      %s1518 = int_to_ptr.vmem [resolvable:$true] %s1517
      %1520 = dma.vmem_to_hbm [thread:$0]  %s1518, 32, %s4, [#allocation4]
    $region25: #{tpu_custom_call.1} parent=1 // pred_fallthru
      _
    // Predicated region
    $region26: #{tpu_custom_call.1} parent=1 // pred_check
      _
    $region27: #{tpu_custom_call.1} parent=1 // pred_check_branch
      %1522 = sbr.rel (0) target = $region29
    $region28: #{tpu_custom_call.1} parent=1 // pred_region
      %1523 = dma.done [#allocation4], 32
    $region29: #{tpu_custom_call.1} parent=1 // pred_fallthru
      _
    %1524 = vsyncpa [#allocation3], 1
    %1525 = vsyncpa [#allocation4], 1

</llo_original>
